<compile_context>
chip_gen: v5e
topology: v5e:2x2
jax: 0.10.0
libtpu: 0.0.40
codegen_flags: <defaults>
</compile_context>

<pallas_src>
import functools

import jax
import jax.numpy as jnp
from jax import lax
from jax.experimental import pallas as pl
from jax.experimental.pallas import tpu as pltpu

NEG_SLOPE = 0.2  # DGL GATConv default negative_slope


def _gat_layer(x, adj_t, w, al_t, ar, b_mean, *, heads, d_out):
    """One GATConv layer + head-mean + ReLU, fully in registers/VMEM.

    x      : (N, F_in)      node features (any float dtype)
    adj_t  : (N, N)  f32    adj_t[dst, src] = 1.0 iff edge src->dst
    w      : (F_in, H*D) bf16   batched per-head projection
    al_t   : (H, H*D)    bf16   block-diag attn_l (row h covers cols h*D:(h+1)*D)
    ar     : (H*D, H)    bf16   block-diag attn_r
    b_mean : (1, D)      f32    mean over heads of per-head bias
    """
    n = x.shape[0]
    xb = x.astype(jnp.bfloat16)
    z = jnp.dot(xb, w, preferred_element_type=jnp.float32)          # (N, H*D) f32
    zb = z.astype(jnp.bfloat16)

    # el_rows[h, src] = <z_h[src], attn_l_h>   (row layout: src on lanes)
    # er_cols[dst, h] = <z_h[dst], attn_r_h>   (col layout: dst on sublanes)
    el_rows = lax.dot_general(al_t, zb, (((1,), (1,)), ((), ())),
                              preferred_element_type=jnp.float32)   # (H, N)
    er_cols = jnp.dot(zb, ar, preferred_element_type=jnp.float32)   # (N, H)

    edge = adj_t > 0.0
    acc = jnp.zeros((n, d_out), jnp.float32)
    for h in range(heads):                       # small static unroll over heads
        s = er_cols[:, h:h + 1] + el_rows[h:h + 1, :]                # (N_dst, N_src)
        s = jnp.where(s > 0, s, NEG_SLOPE * s)                       # LeakyReLU
        masked = jnp.where(edge, s, -1e30)
        m = jnp.max(masked, axis=-1, keepdims=True)                  # lane reduce
        p = jnp.where(edge, jnp.exp(masked - m), 0.0)
        denom = jnp.sum(p, axis=-1, keepdims=True)
        alpha = p * pl.reciprocal(denom, approx=True)                # softmax over src
        z_h = zb[:, h * d_out:(h + 1) * d_out]                       # (N, D)
        acc = acc + jnp.dot(alpha.astype(jnp.bfloat16), z_h,
                            preferred_element_type=jnp.float32)      # NN matmul
    out = acc * (1.0 / heads) + b_mean           # mean over heads (+ mean bias)
    return jnp.maximum(out, 0.0)                 # ReLU


def gcn_fused_kernel(x_ref, adjt_ref, w1_ref, alt1_ref, ar1_ref, bm1_ref,
                     w2_ref, alt2_ref, ar2_ref, bm2_ref, o_ref,
                     *, heads, d1, d2):
    adj_t = adjt_ref[...]
    h1 = _gat_layer(x_ref[...], adj_t, w1_ref[...], alt1_ref[...], ar1_ref[...],
                    bm1_ref[...], heads=heads, d_out=d1)
    h2 = _gat_layer(h1, adj_t, w2_ref[...], alt2_ref[...], ar2_ref[...],
                    bm2_ref[...], heads=heads, d_out=d2)
    o_ref[...] = h2.astype(o_ref.dtype)


def _pack_gat_params(w, attn_l, attn_r, bias, d_pad=None):
    """Pack per-head GAT params (H, F_in, D) into batched/block-diag operands."""
    H, f_in, d = w.shape
    dp = d if d_pad is None else d_pad
    if dp != d:
        pad = ((0, 0), (0, 0), (0, dp - d))
        w = jnp.pad(w, pad)
        attn_l = jnp.pad(attn_l, pad)
        attn_r = jnp.pad(attn_r, pad)
        bias = jnp.pad(bias, pad)
    # (H, F_in, Dp) -> (F_in, H*Dp); column h*Dp + j = W[h, :, j]
    w_all = jnp.transpose(w, (1, 0, 2)).reshape(f_in, H * dp)
    al = attn_l[:, 0, :]                                   # (H, Dp)
    ar = attn_r[:, 0, :]                                   # (H, Dp)
    eye = jnp.eye(H, dtype=w.dtype)
    al_t = (eye[:, :, None] * al[None, :, :]).reshape(H, H * dp)     # (H, H*Dp)
    ar_b = (eye[:, None, :] * ar[:, :, None]).reshape(H * dp, H)     # (H*Dp, H)
    b_mean = jnp.mean(bias[:, 0, :], axis=0, keepdims=True)          # (1, Dp)
    return (w_all.astype(jnp.bfloat16), al_t.astype(jnp.bfloat16),
            ar_b.astype(jnp.bfloat16), b_mean.astype(jnp.float32))


def gcn_forward(adj, x, params):
    """adj[src, dst] dense edge mask (self-loops required), x: (N, in_feats)."""
    N, _ = x.shape
    H, _, d1 = params["w1"].shape
    d2 = params["w2"].shape[2]
    d2p = -(-d2 // 128) * 128                      # lane-dense output store

    w1, alt1, ar1, bm1 = _pack_gat_params(params["w1"], params["al1"],
                                          params["ar1"], params["b1"])
    w2, alt2, ar2, bm2 = _pack_gat_params(params["w2"], params["al2"],
                                          params["ar2"], params["b2"], d_pad=d2p)

    adj_t = jnp.transpose(adj).astype(jnp.float32)   # [dst, src] orientation
    x_bf = x.astype(jnp.bfloat16)

    kernel = functools.partial(gcn_fused_kernel, heads=H, d1=d1, d2=d2p)
    vmem = pl.BlockSpec(memory_space=pltpu.MemorySpace.VMEM)
    out = pl.pallas_call(
        kernel,
        out_shape=jax.ShapeDtypeStruct((N, d2p), jnp.float32),
        in_specs=[vmem] * 10,
        out_specs=vmem,
    )(x_bf, adj_t, w1, alt1, ar1, bm1, w2, alt2, ar2, bm2)
    return out[:, :d2]


if __name__ == "__main__":
    key = jax.random.PRNGKey(0)
    N = 16                   # number of graph nodes
    gnn_size = (8, 16, 8)    # (in_feats, hidden, out_feats)
    H = 4                    # attn_heads

    keys = jax.random.split(key, 10)
    x = jax.random.normal(keys[0], (N, gnn_size[0]), jnp.float32)

    # random directed graph + self-loops (dense mask), adj[src, dst]
    adj = (jax.random.uniform(keys[1], (N, N)) < 0.3).astype(jnp.float32)
    adj = jnp.maximum(adj, jnp.eye(N, dtype=jnp.float32))

    def init(k, shape, scale=0.1):
        return scale * jax.random.normal(k, shape, jnp.float32)

    params = dict(
        w1=init(keys[2], (H, gnn_size[0], gnn_size[1])),
        al1=init(keys[3], (H, 1, gnn_size[1])),
        ar1=init(keys[4], (H, 1, gnn_size[1])),
        b1=init(keys[5], (H, 1, gnn_size[1])),
        w2=init(keys[6], (H, gnn_size[1], gnn_size[2])),
        al2=init(keys[7], (H, 1, gnn_size[2])),
        ar2=init(keys[8], (H, 1, gnn_size[2])),
        b2=init(keys[9], (H, 1, gnn_size[2])),
    )

    out = jax.jit(gcn_forward)(adj, x, params)
    jax.block_until_ready(out)
    assert out.shape == (N, gnn_size[2])
    print("KERNEL_OK")
</pallas_src>

<mosaic_0001>
module attributes {stable_mosaic.version = 11 : i64} {
  func.func @gcn_fused_kernel(%arg0: memref<16x8xbf16, #tpu.memory_space<vmem>>, %arg1: memref<16x16xf32, #tpu.memory_space<vmem>>, %arg2: memref<8x64xbf16, #tpu.memory_space<vmem>>, %arg3: memref<4x64xbf16, #tpu.memory_space<vmem>>, %arg4: memref<64x4xbf16, #tpu.memory_space<vmem>>, %arg5: memref<1x16xf32, #tpu.memory_space<vmem>>, %arg6: memref<16x512xbf16, #tpu.memory_space<vmem>>, %arg7: memref<4x512xbf16, #tpu.memory_space<vmem>>, %arg8: memref<512x4xbf16, #tpu.memory_space<vmem>>, %arg9: memref<1x128xf32, #tpu.memory_space<vmem>>, %arg10: memref<16x128xf32, #tpu.memory_space<vmem>>) attributes {dimension_semantics = [], scalar_prefetch = 0 : i64, scratch_operands = 0 : i64, tpu.core_type = #tpu.core_type<tc>} {
    %c0 = arith.constant 0 : index
    %c0_0 = arith.constant 0 : index
    %0 = vector.load %arg1[%c0, %c0_0] : memref<16x16xf32, #tpu.memory_space<vmem>>, vector<16x16xf32>
    %c0_1 = arith.constant 0 : index
    %c0_2 = arith.constant 0 : index
    %1 = vector.load %arg0[%c0_1, %c0_2] : memref<16x8xbf16, #tpu.memory_space<vmem>>, vector<16x8xbf16>
    %c0_3 = arith.constant 0 : index
    %c0_4 = arith.constant 0 : index
    %2 = vector.load %arg2[%c0_3, %c0_4] : memref<8x64xbf16, #tpu.memory_space<vmem>>, vector<8x64xbf16>
    %c0_5 = arith.constant 0 : index
    %c0_6 = arith.constant 0 : index
    %3 = vector.load %arg3[%c0_5, %c0_6] : memref<4x64xbf16, #tpu.memory_space<vmem>>, vector<4x64xbf16>
    %c0_7 = arith.constant 0 : index
    %c0_8 = arith.constant 0 : index
    %4 = vector.load %arg4[%c0_7, %c0_8] : memref<64x4xbf16, #tpu.memory_space<vmem>>, vector<64x4xbf16>
    %c0_9 = arith.constant 0 : index
    %c0_10 = arith.constant 0 : index
    %5 = vector.load %arg5[%c0_9, %c0_10] : memref<1x16xf32, #tpu.memory_space<vmem>>, vector<1x16xf32>
    %cst = arith.constant dense<0.000000e+00> : vector<16x64xf32>
    %6 = tpu.matmul %1, %2, %cst {dimension_numbers = #tpu.dot_dimension_numbers<[1], [0], [0], [1], [0, 0, 1, 1], [], []>} : vector<16x8xbf16>, vector<8x64xbf16>, vector<16x64xf32> -> vector<16x64xf32>
    %7 = arith.truncf %6 : vector<16x64xf32> to vector<16x64xbf16>
    %cst_11 = arith.constant dense<0.000000e+00> : vector<4x16xf32>
    %8 = tpu.matmul %3, %7, %cst_11 {dimension_numbers = #tpu.dot_dimension_numbers<[1], [1], [0], [0], [0, 0, 1, 0], [], []>} : vector<4x64xbf16>, vector<16x64xbf16>, vector<4x16xf32> -> vector<4x16xf32>
    %cst_12 = arith.constant dense<0.000000e+00> : vector<16x4xf32>
    %9 = tpu.matmul %7, %4, %cst_12 {dimension_numbers = #tpu.dot_dimension_numbers<[1], [0], [0], [1], [0, 0, 1, 1], [], []>} : vector<16x64xbf16>, vector<64x4xbf16>, vector<16x4xf32> -> vector<16x4xf32>
    %cst_13 = arith.constant 0.000000e+00 : f32
    %10 = vector.broadcast %cst_13 : f32 to vector<16x16xf32>
    %11 = arith.cmpf ogt, %0, %10 : vector<16x16xf32>
    %cst_14 = arith.constant 0.000000e+00 : f32
    %12 = vector.broadcast %cst_14 : f32 to vector<16x16xf32>
    %13 = vector.extract_strided_slice %9 {offsets = [0, 0], sizes = [16, 1], strides = [1, 1]} : vector<16x4xf32> to vector<16x1xf32>
    %14 = vector.extract_strided_slice %8 {offsets = [0, 0], sizes = [1, 16], strides = [1, 1]} : vector<4x16xf32> to vector<1x16xf32>
    %15 = vector.broadcast %13 : vector<16x1xf32> to vector<16x16xf32>
    %16 = vector.broadcast %14 : vector<1x16xf32> to vector<16x16xf32>
    %17 = arith.addf %15, %16 : vector<16x16xf32>
    %cst_15 = arith.constant 0.000000e+00 : f32
    %18 = vector.broadcast %cst_15 : f32 to vector<16x16xf32>
    %19 = arith.cmpf ogt, %17, %18 : vector<16x16xf32>
    %cst_16 = arith.constant 2.000000e-01 : f32
    %20 = vector.broadcast %cst_16 : f32 to vector<16x16xf32>
    %21 = arith.mulf %20, %17 : vector<16x16xf32>
    %22 = arith.select %19, %17, %21 : vector<16x16xi1>, vector<16x16xf32>
    %cst_17 = arith.constant -1.000000e+30 : f32
    %23 = vector.broadcast %cst_17 : f32 to vector<16x16xf32>
    %24 = arith.select %11, %22, %23 : vector<16x16xi1>, vector<16x16xf32>
    %cst_18 = arith.constant dense<0xFF800000> : vector<16xf32>
    %25 = vector.multi_reduction <maximumf>, %24, %cst_18 [1] : vector<16x16xf32> to vector<16xf32>
    %26 = vector.shape_cast %25 : vector<16xf32> to vector<16x1xf32>
    %27 = vector.broadcast %26 : vector<16x1xf32> to vector<16x16xf32>
    %28 = arith.subf %24, %27 : vector<16x16xf32>
    %29 = math.exp %28 : vector<16x16xf32>
    %cst_19 = arith.constant 0.000000e+00 : f32
    %30 = vector.broadcast %cst_19 : f32 to vector<16x16xf32>
    %31 = arith.select %11, %29, %30 : vector<16x16xi1>, vector<16x16xf32>
    %cst_20 = arith.constant dense<0.000000e+00> : vector<16xf32>
    %32 = vector.multi_reduction <add>, %31, %cst_20 [1] : vector<16x16xf32> to vector<16xf32>
    %33 = vector.shape_cast %32 : vector<16xf32> to vector<16x1xf32>
    %34 = tpu.reciprocal %33 {approx = true} : vector<16x1xf32> -> vector<16x1xf32>
    %35 = vector.broadcast %34 : vector<16x1xf32> to vector<16x16xf32>
    %36 = arith.mulf %31, %35 : vector<16x16xf32>
    %37 = vector.extract_strided_slice %7 {offsets = [0, 0], sizes = [16, 16], strides = [1, 1]} : vector<16x64xbf16> to vector<16x16xbf16>
    %38 = arith.truncf %36 : vector<16x16xf32> to vector<16x16xbf16>
    %cst_21 = arith.constant dense<0.000000e+00> : vector<16x16xf32>
    %39 = tpu.matmul %38, %37, %cst_21 {dimension_numbers = #tpu.dot_dimension_numbers<[1], [0], [0], [1], [0, 0, 1, 1], [], []>} : vector<16x16xbf16>, vector<16x16xbf16>, vector<16x16xf32> -> vector<16x16xf32>
    %40 = arith.addf %12, %39 : vector<16x16xf32>
    %41 = vector.extract_strided_slice %9 {offsets = [0, 1], sizes = [16, 1], strides = [1, 1]} : vector<16x4xf32> to vector<16x1xf32>
    %42 = vector.extract_strided_slice %8 {offsets = [1, 0], sizes = [1, 16], strides = [1, 1]} : vector<4x16xf32> to vector<1x16xf32>
    %43 = vector.broadcast %41 : vector<16x1xf32> to vector<16x16xf32>
    %44 = vector.broadcast %42 : vector<1x16xf32> to vector<16x16xf32>
    %45 = arith.addf %43, %44 : vector<16x16xf32>
    %cst_22 = arith.constant 0.000000e+00 : f32
    %46 = vector.broadcast %cst_22 : f32 to vector<16x16xf32>
    %47 = arith.cmpf ogt, %45, %46 : vector<16x16xf32>
    %cst_23 = arith.constant 2.000000e-01 : f32
    %48 = vector.broadcast %cst_23 : f32 to vector<16x16xf32>
    %49 = arith.mulf %48, %45 : vector<16x16xf32>
    %50 = arith.select %47, %45, %49 : vector<16x16xi1>, vector<16x16xf32>
    %cst_24 = arith.constant -1.000000e+30 : f32
    %51 = vector.broadcast %cst_24 : f32 to vector<16x16xf32>
    %52 = arith.select %11, %50, %51 : vector<16x16xi1>, vector<16x16xf32>
    %cst_25 = arith.constant dense<0xFF800000> : vector<16xf32>
    %53 = vector.multi_reduction <maximumf>, %52, %cst_25 [1] : vector<16x16xf32> to vector<16xf32>
    %54 = vector.shape_cast %53 : vector<16xf32> to vector<16x1xf32>
    %55 = vector.broadcast %54 : vector<16x1xf32> to vector<16x16xf32>
    %56 = arith.subf %52, %55 : vector<16x16xf32>
    %57 = math.exp %56 : vector<16x16xf32>
    %cst_26 = arith.constant 0.000000e+00 : f32
    %58 = vector.broadcast %cst_26 : f32 to vector<16x16xf32>
    %59 = arith.select %11, %57, %58 : vector<16x16xi1>, vector<16x16xf32>
    %cst_27 = arith.constant dense<0.000000e+00> : vector<16xf32>
    %60 = vector.multi_reduction <add>, %59, %cst_27 [1] : vector<16x16xf32> to vector<16xf32>
    %61 = vector.shape_cast %60 : vector<16xf32> to vector<16x1xf32>
    %62 = tpu.reciprocal %61 {approx = true} : vector<16x1xf32> -> vector<16x1xf32>
    %63 = vector.broadcast %62 : vector<16x1xf32> to vector<16x16xf32>
    %64 = arith.mulf %59, %63 : vector<16x16xf32>
    %65 = vector.extract_strided_slice %7 {offsets = [0, 16], sizes = [16, 16], strides = [1, 1]} : vector<16x64xbf16> to vector<16x16xbf16>
    %66 = arith.truncf %64 : vector<16x16xf32> to vector<16x16xbf16>
    %cst_28 = arith.constant dense<0.000000e+00> : vector<16x16xf32>
    %67 = tpu.matmul %66, %65, %cst_28 {dimension_numbers = #tpu.dot_dimension_numbers<[1], [0], [0], [1], [0, 0, 1, 1], [], []>} : vector<16x16xbf16>, vector<16x16xbf16>, vector<16x16xf32> -> vector<16x16xf32>
    %68 = arith.addf %40, %67 : vector<16x16xf32>
    %69 = vector.extract_strided_slice %9 {offsets = [0, 2], sizes = [16, 1], strides = [1, 1]} : vector<16x4xf32> to vector<16x1xf32>
    %70 = vector.extract_strided_slice %8 {offsets = [2, 0], sizes = [1, 16], strides = [1, 1]} : vector<4x16xf32> to vector<1x16xf32>
    %71 = vector.broadcast %69 : vector<16x1xf32> to vector<16x16xf32>
    %72 = vector.broadcast %70 : vector<1x16xf32> to vector<16x16xf32>
    %73 = arith.addf %71, %72 : vector<16x16xf32>
    %cst_29 = arith.constant 0.000000e+00 : f32
    %74 = vector.broadcast %cst_29 : f32 to vector<16x16xf32>
    %75 = arith.cmpf ogt, %73, %74 : vector<16x16xf32>
    %cst_30 = arith.constant 2.000000e-01 : f32
    %76 = vector.broadcast %cst_30 : f32 to vector<16x16xf32>
    %77 = arith.mulf %76, %73 : vector<16x16xf32>
    %78 = arith.select %75, %73, %77 : vector<16x16xi1>, vector<16x16xf32>
    %cst_31 = arith.constant -1.000000e+30 : f32
    %79 = vector.broadcast %cst_31 : f32 to vector<16x16xf32>
    %80 = arith.select %11, %78, %79 : vector<16x16xi1>, vector<16x16xf32>
    %cst_32 = arith.constant dense<0xFF800000> : vector<16xf32>
    %81 = vector.multi_reduction <maximumf>, %80, %cst_32 [1] : vector<16x16xf32> to vector<16xf32>
    %82 = vector.shape_cast %81 : vector<16xf32> to vector<16x1xf32>
    %83 = vector.broadcast %82 : vector<16x1xf32> to vector<16x16xf32>
    %84 = arith.subf %80, %83 : vector<16x16xf32>
    %85 = math.exp %84 : vector<16x16xf32>
    %cst_33 = arith.constant 0.000000e+00 : f32
    %86 = vector.broadcast %cst_33 : f32 to vector<16x16xf32>
    %87 = arith.select %11, %85, %86 : vector<16x16xi1>, vector<16x16xf32>
    %cst_34 = arith.constant dense<0.000000e+00> : vector<16xf32>
    %88 = vector.multi_reduction <add>, %87, %cst_34 [1] : vector<16x16xf32> to vector<16xf32>
    %89 = vector.shape_cast %88 : vector<16xf32> to vector<16x1xf32>
    %90 = tpu.reciprocal %89 {approx = true} : vector<16x1xf32> -> vector<16x1xf32>
    %91 = vector.broadcast %90 : vector<16x1xf32> to vector<16x16xf32>
    %92 = arith.mulf %87, %91 : vector<16x16xf32>
    %93 = vector.extract_strided_slice %7 {offsets = [0, 32], sizes = [16, 16], strides = [1, 1]} : vector<16x64xbf16> to vector<16x16xbf16>
    %94 = arith.truncf %92 : vector<16x16xf32> to vector<16x16xbf16>
    %cst_35 = arith.constant dense<0.000000e+00> : vector<16x16xf32>
    %95 = tpu.matmul %94, %93, %cst_35 {dimension_numbers = #tpu.dot_dimension_numbers<[1], [0], [0], [1], [0, 0, 1, 1], [], []>} : vector<16x16xbf16>, vector<16x16xbf16>, vector<16x16xf32> -> vector<16x16xf32>
    %96 = arith.addf %68, %95 : vector<16x16xf32>
    %97 = vector.extract_strided_slice %9 {offsets = [0, 3], sizes = [16, 1], strides = [1, 1]} : vector<16x4xf32> to vector<16x1xf32>
    %98 = vector.extract_strided_slice %8 {offsets = [3, 0], sizes = [1, 16], strides = [1, 1]} : vector<4x16xf32> to vector<1x16xf32>
    %99 = vector.broadcast %97 : vector<16x1xf32> to vector<16x16xf32>
    %100 = vector.broadcast %98 : vector<1x16xf32> to vector<16x16xf32>
    %101 = arith.addf %99, %100 : vector<16x16xf32>
    %cst_36 = arith.constant 0.000000e+00 : f32
    %102 = vector.broadcast %cst_36 : f32 to vector<16x16xf32>
    %103 = arith.cmpf ogt, %101, %102 : vector<16x16xf32>
    %cst_37 = arith.constant 2.000000e-01 : f32
    %104 = vector.broadcast %cst_37 : f32 to vector<16x16xf32>
    %105 = arith.mulf %104, %101 : vector<16x16xf32>
    %106 = arith.select %103, %101, %105 : vector<16x16xi1>, vector<16x16xf32>
    %cst_38 = arith.constant -1.000000e+30 : f32
    %107 = vector.broadcast %cst_38 : f32 to vector<16x16xf32>
    %108 = arith.select %11, %106, %107 : vector<16x16xi1>, vector<16x16xf32>
    %cst_39 = arith.constant dense<0xFF800000> : vector<16xf32>
    %109 = vector.multi_reduction <maximumf>, %108, %cst_39 [1] : vector<16x16xf32> to vector<16xf32>
    %110 = vector.shape_cast %109 : vector<16xf32> to vector<16x1xf32>
    %111 = vector.broadcast %110 : vector<16x1xf32> to vector<16x16xf32>
    %112 = arith.subf %108, %111 : vector<16x16xf32>
    %113 = math.exp %112 : vector<16x16xf32>
    %cst_40 = arith.constant 0.000000e+00 : f32
    %114 = vector.broadcast %cst_40 : f32 to vector<16x16xf32>
    %115 = arith.select %11, %113, %114 : vector<16x16xi1>, vector<16x16xf32>
    %cst_41 = arith.constant dense<0.000000e+00> : vector<16xf32>
    %116 = vector.multi_reduction <add>, %115, %cst_41 [1] : vector<16x16xf32> to vector<16xf32>
    %117 = vector.shape_cast %116 : vector<16xf32> to vector<16x1xf32>
    %118 = tpu.reciprocal %117 {approx = true} : vector<16x1xf32> -> vector<16x1xf32>
    %119 = vector.broadcast %118 : vector<16x1xf32> to vector<16x16xf32>
    %120 = arith.mulf %115, %119 : vector<16x16xf32>
    %121 = vector.extract_strided_slice %7 {offsets = [0, 48], sizes = [16, 16], strides = [1, 1]} : vector<16x64xbf16> to vector<16x16xbf16>
    %122 = arith.truncf %120 : vector<16x16xf32> to vector<16x16xbf16>
    %cst_42 = arith.constant dense<0.000000e+00> : vector<16x16xf32>
    %123 = tpu.matmul %122, %121, %cst_42 {dimension_numbers = #tpu.dot_dimension_numbers<[1], [0], [0], [1], [0, 0, 1, 1], [], []>} : vector<16x16xbf16>, vector<16x16xbf16>, vector<16x16xf32> -> vector<16x16xf32>
    %124 = arith.addf %96, %123 : vector<16x16xf32>
    %cst_43 = arith.constant 2.500000e-01 : f32
    %125 = vector.broadcast %cst_43 : f32 to vector<16x16xf32>
    %126 = arith.mulf %124, %125 : vector<16x16xf32>
    %127 = vector.broadcast %5 : vector<1x16xf32> to vector<16x16xf32>
    %128 = arith.addf %126, %127 : vector<16x16xf32>
    %cst_44 = arith.constant 0.000000e+00 : f32
    %129 = vector.broadcast %cst_44 : f32 to vector<16x16xf32>
    %130 = arith.maximumf %128, %129 : vector<16x16xf32>
    %c0_45 = arith.constant 0 : index
    %c0_46 = arith.constant 0 : index
    %131 = vector.load %arg6[%c0_45, %c0_46] : memref<16x512xbf16, #tpu.memory_space<vmem>>, vector<16x512xbf16>
    %c0_47 = arith.constant 0 : index
    %c0_48 = arith.constant 0 : index
    %132 = vector.load %arg7[%c0_47, %c0_48] : memref<4x512xbf16, #tpu.memory_space<vmem>>, vector<4x512xbf16>
    %c0_49 = arith.constant 0 : index
    %c0_50 = arith.constant 0 : index
    %133 = vector.load %arg8[%c0_49, %c0_50] : memref<512x4xbf16, #tpu.memory_space<vmem>>, vector<512x4xbf16>
    %c0_51 = arith.constant 0 : index
    %c0_52 = arith.constant 0 : index
    %134 = vector.load %arg9[%c0_51, %c0_52] : memref<1x128xf32, #tpu.memory_space<vmem>>, vector<1x128xf32>
    %135 = arith.truncf %130 : vector<16x16xf32> to vector<16x16xbf16>
    %cst_53 = arith.constant dense<0.000000e+00> : vector<16x512xf32>
    %136 = tpu.matmul %135, %131, %cst_53 {dimension_numbers = #tpu.dot_dimension_numbers<[1], [0], [0], [1], [0, 0, 1, 1], [], []>} : vector<16x16xbf16>, vector<16x512xbf16>, vector<16x512xf32> -> vector<16x512xf32>
    %137 = arith.truncf %136 : vector<16x512xf32> to vector<16x512xbf16>
    %cst_54 = arith.constant dense<0.000000e+00> : vector<4x16xf32>
    %138 = tpu.matmul %132, %137, %cst_54 {dimension_numbers = #tpu.dot_dimension_numbers<[1], [1], [0], [0], [0, 0, 1, 0], [], []>} : vector<4x512xbf16>, vector<16x512xbf16>, vector<4x16xf32> -> vector<4x16xf32>
    %cst_55 = arith.constant dense<0.000000e+00> : vector<16x4xf32>
    %139 = tpu.matmul %137, %133, %cst_55 {dimension_numbers = #tpu.dot_dimension_numbers<[1], [0], [0], [1], [0, 0, 1, 1], [], []>} : vector<16x512xbf16>, vector<512x4xbf16>, vector<16x4xf32> -> vector<16x4xf32>
    %cst_56 = arith.constant 0.000000e+00 : f32
    %140 = vector.broadcast %cst_56 : f32 to vector<16x16xf32>
    %141 = arith.cmpf ogt, %0, %140 : vector<16x16xf32>
    %cst_57 = arith.constant 0.000000e+00 : f32
    %142 = vector.broadcast %cst_57 : f32 to vector<16x128xf32>
    %143 = vector.extract_strided_slice %139 {offsets = [0, 0], sizes = [16, 1], strides = [1, 1]} : vector<16x4xf32> to vector<16x1xf32>
    %144 = vector.extract_strided_slice %138 {offsets = [0, 0], sizes = [1, 16], strides = [1, 1]} : vector<4x16xf32> to vector<1x16xf32>
    %145 = vector.broadcast %143 : vector<16x1xf32> to vector<16x16xf32>
    %146 = vector.broadcast %144 : vector<1x16xf32> to vector<16x16xf32>
    %147 = arith.addf %145, %146 : vector<16x16xf32>
    %cst_58 = arith.constant 0.000000e+00 : f32
    %148 = vector.broadcast %cst_58 : f32 to vector<16x16xf32>
    %149 = arith.cmpf ogt, %147, %148 : vector<16x16xf32>
    %cst_59 = arith.constant 2.000000e-01 : f32
    %150 = vector.broadcast %cst_59 : f32 to vector<16x16xf32>
    %151 = arith.mulf %150, %147 : vector<16x16xf32>
    %152 = arith.select %149, %147, %151 : vector<16x16xi1>, vector<16x16xf32>
    %cst_60 = arith.constant -1.000000e+30 : f32
    %153 = vector.broadcast %cst_60 : f32 to vector<16x16xf32>
    %154 = arith.select %141, %152, %153 : vector<16x16xi1>, vector<16x16xf32>
    %cst_61 = arith.constant dense<0xFF800000> : vector<16xf32>
    %155 = vector.multi_reduction <maximumf>, %154, %cst_61 [1] : vector<16x16xf32> to vector<16xf32>
    %156 = vector.shape_cast %155 : vector<16xf32> to vector<16x1xf32>
    %157 = vector.broadcast %156 : vector<16x1xf32> to vector<16x16xf32>
    %158 = arith.subf %154, %157 : vector<16x16xf32>
    %159 = math.exp %158 : vector<16x16xf32>
    %cst_62 = arith.constant 0.000000e+00 : f32
    %160 = vector.broadcast %cst_62 : f32 to vector<16x16xf32>
    %161 = arith.select %141, %159, %160 : vector<16x16xi1>, vector<16x16xf32>
    %cst_63 = arith.constant dense<0.000000e+00> : vector<16xf32>
    %162 = vector.multi_reduction <add>, %161, %cst_63 [1] : vector<16x16xf32> to vector<16xf32>
    %163 = vector.shape_cast %162 : vector<16xf32> to vector<16x1xf32>
    %164 = tpu.reciprocal %163 {approx = true} : vector<16x1xf32> -> vector<16x1xf32>
    %165 = vector.broadcast %164 : vector<16x1xf32> to vector<16x16xf32>
    %166 = arith.mulf %161, %165 : vector<16x16xf32>
    %167 = vector.extract_strided_slice %137 {offsets = [0, 0], sizes = [16, 128], strides = [1, 1]} : vector<16x512xbf16> to vector<16x128xbf16>
    %168 = arith.truncf %166 : vector<16x16xf32> to vector<16x16xbf16>
    %cst_64 = arith.constant dense<0.000000e+00> : vector<16x128xf32>
    %169 = tpu.matmul %168, %167, %cst_64 {dimension_numbers = #tpu.dot_dimension_numbers<[1], [0], [0], [1], [0, 0, 1, 1], [], []>} : vector<16x16xbf16>, vector<16x128xbf16>, vector<16x128xf32> -> vector<16x128xf32>
    %170 = arith.addf %142, %169 : vector<16x128xf32>
    %171 = vector.extract_strided_slice %139 {offsets = [0, 1], sizes = [16, 1], strides = [1, 1]} : vector<16x4xf32> to vector<16x1xf32>
    %172 = vector.extract_strided_slice %138 {offsets = [1, 0], sizes = [1, 16], strides = [1, 1]} : vector<4x16xf32> to vector<1x16xf32>
    %173 = vector.broadcast %171 : vector<16x1xf32> to vector<16x16xf32>
    %174 = vector.broadcast %172 : vector<1x16xf32> to vector<16x16xf32>
    %175 = arith.addf %173, %174 : vector<16x16xf32>
    %cst_65 = arith.constant 0.000000e+00 : f32
    %176 = vector.broadcast %cst_65 : f32 to vector<16x16xf32>
    %177 = arith.cmpf ogt, %175, %176 : vector<16x16xf32>
    %cst_66 = arith.constant 2.000000e-01 : f32
    %178 = vector.broadcast %cst_66 : f32 to vector<16x16xf32>
    %179 = arith.mulf %178, %175 : vector<16x16xf32>
    %180 = arith.select %177, %175, %179 : vector<16x16xi1>, vector<16x16xf32>
    %cst_67 = arith.constant -1.000000e+30 : f32
    %181 = vector.broadcast %cst_67 : f32 to vector<16x16xf32>
    %182 = arith.select %141, %180, %181 : vector<16x16xi1>, vector<16x16xf32>
    %cst_68 = arith.constant dense<0xFF800000> : vector<16xf32>
    %183 = vector.multi_reduction <maximumf>, %182, %cst_68 [1] : vector<16x16xf32> to vector<16xf32>
    %184 = vector.shape_cast %183 : vector<16xf32> to vector<16x1xf32>
    %185 = vector.broadcast %184 : vector<16x1xf32> to vector<16x16xf32>
    %186 = arith.subf %182, %185 : vector<16x16xf32>
    %187 = math.exp %186 : vector<16x16xf32>
    %cst_69 = arith.constant 0.000000e+00 : f32
    %188 = vector.broadcast %cst_69 : f32 to vector<16x16xf32>
    %189 = arith.select %141, %187, %188 : vector<16x16xi1>, vector<16x16xf32>
    %cst_70 = arith.constant dense<0.000000e+00> : vector<16xf32>
    %190 = vector.multi_reduction <add>, %189, %cst_70 [1] : vector<16x16xf32> to vector<16xf32>
    %191 = vector.shape_cast %190 : vector<16xf32> to vector<16x1xf32>
    %192 = tpu.reciprocal %191 {approx = true} : vector<16x1xf32> -> vector<16x1xf32>
    %193 = vector.broadcast %192 : vector<16x1xf32> to vector<16x16xf32>
    %194 = arith.mulf %189, %193 : vector<16x16xf32>
    %195 = vector.extract_strided_slice %137 {offsets = [0, 128], sizes = [16, 128], strides = [1, 1]} : vector<16x512xbf16> to vector<16x128xbf16>
    %196 = arith.truncf %194 : vector<16x16xf32> to vector<16x16xbf16>
    %cst_71 = arith.constant dense<0.000000e+00> : vector<16x128xf32>
    %197 = tpu.matmul %196, %195, %cst_71 {dimension_numbers = #tpu.dot_dimension_numbers<[1], [0], [0], [1], [0, 0, 1, 1], [], []>} : vector<16x16xbf16>, vector<16x128xbf16>, vector<16x128xf32> -> vector<16x128xf32>
    %198 = arith.addf %170, %197 : vector<16x128xf32>
    %199 = vector.extract_strided_slice %139 {offsets = [0, 2], sizes = [16, 1], strides = [1, 1]} : vector<16x4xf32> to vector<16x1xf32>
    %200 = vector.extract_strided_slice %138 {offsets = [2, 0], sizes = [1, 16], strides = [1, 1]} : vector<4x16xf32> to vector<1x16xf32>
    %201 = vector.broadcast %199 : vector<16x1xf32> to vector<16x16xf32>
    %202 = vector.broadcast %200 : vector<1x16xf32> to vector<16x16xf32>
    %203 = arith.addf %201, %202 : vector<16x16xf32>
    %cst_72 = arith.constant 0.000000e+00 : f32
    %204 = vector.broadcast %cst_72 : f32 to vector<16x16xf32>
    %205 = arith.cmpf ogt, %203, %204 : vector<16x16xf32>
    %cst_73 = arith.constant 2.000000e-01 : f32
    %206 = vector.broadcast %cst_73 : f32 to vector<16x16xf32>
    %207 = arith.mulf %206, %203 : vector<16x16xf32>
    %208 = arith.select %205, %203, %207 : vector<16x16xi1>, vector<16x16xf32>
    %cst_74 = arith.constant -1.000000e+30 : f32
    %209 = vector.broadcast %cst_74 : f32 to vector<16x16xf32>
    %210 = arith.select %141, %208, %209 : vector<16x16xi1>, vector<16x16xf32>
    %cst_75 = arith.constant dense<0xFF800000> : vector<16xf32>
    %211 = vector.multi_reduction <maximumf>, %210, %cst_75 [1] : vector<16x16xf32> to vector<16xf32>
    %212 = vector.shape_cast %211 : vector<16xf32> to vector<16x1xf32>
    %213 = vector.broadcast %212 : vector<16x1xf32> to vector<16x16xf32>
    %214 = arith.subf %210, %213 : vector<16x16xf32>
    %215 = math.exp %214 : vector<16x16xf32>
    %cst_76 = arith.constant 0.000000e+00 : f32
    %216 = vector.broadcast %cst_76 : f32 to vector<16x16xf32>
    %217 = arith.select %141, %215, %216 : vector<16x16xi1>, vector<16x16xf32>
    %cst_77 = arith.constant dense<0.000000e+00> : vector<16xf32>
    %218 = vector.multi_reduction <add>, %217, %cst_77 [1] : vector<16x16xf32> to vector<16xf32>
    %219 = vector.shape_cast %218 : vector<16xf32> to vector<16x1xf32>
    %220 = tpu.reciprocal %219 {approx = true} : vector<16x1xf32> -> vector<16x1xf32>
    %221 = vector.broadcast %220 : vector<16x1xf32> to vector<16x16xf32>
    %222 = arith.mulf %217, %221 : vector<16x16xf32>
    %223 = vector.extract_strided_slice %137 {offsets = [0, 256], sizes = [16, 128], strides = [1, 1]} : vector<16x512xbf16> to vector<16x128xbf16>
    %224 = arith.truncf %222 : vector<16x16xf32> to vector<16x16xbf16>
    %cst_78 = arith.constant dense<0.000000e+00> : vector<16x128xf32>
    %225 = tpu.matmul %224, %223, %cst_78 {dimension_numbers = #tpu.dot_dimension_numbers<[1], [0], [0], [1], [0, 0, 1, 1], [], []>} : vector<16x16xbf16>, vector<16x128xbf16>, vector<16x128xf32> -> vector<16x128xf32>
    %226 = arith.addf %198, %225 : vector<16x128xf32>
    %227 = vector.extract_strided_slice %139 {offsets = [0, 3], sizes = [16, 1], strides = [1, 1]} : vector<16x4xf32> to vector<16x1xf32>
    %228 = vector.extract_strided_slice %138 {offsets = [3, 0], sizes = [1, 16], strides = [1, 1]} : vector<4x16xf32> to vector<1x16xf32>
    %229 = vector.broadcast %227 : vector<16x1xf32> to vector<16x16xf32>
    %230 = vector.broadcast %228 : vector<1x16xf32> to vector<16x16xf32>
    %231 = arith.addf %229, %230 : vector<16x16xf32>
    %cst_79 = arith.constant 0.000000e+00 : f32
    %232 = vector.broadcast %cst_79 : f32 to vector<16x16xf32>
    %233 = arith.cmpf ogt, %231, %232 : vector<16x16xf32>
    %cst_80 = arith.constant 2.000000e-01 : f32
    %234 = vector.broadcast %cst_80 : f32 to vector<16x16xf32>
    %235 = arith.mulf %234, %231 : vector<16x16xf32>
    %236 = arith.select %233, %231, %235 : vector<16x16xi1>, vector<16x16xf32>
    %cst_81 = arith.constant -1.000000e+30 : f32
    %237 = vector.broadcast %cst_81 : f32 to vector<16x16xf32>
    %238 = arith.select %141, %236, %237 : vector<16x16xi1>, vector<16x16xf32>
    %cst_82 = arith.constant dense<0xFF800000> : vector<16xf32>
    %239 = vector.multi_reduction <maximumf>, %238, %cst_82 [1] : vector<16x16xf32> to vector<16xf32>
    %240 = vector.shape_cast %239 : vector<16xf32> to vector<16x1xf32>
    %241 = vector.broadcast %240 : vector<16x1xf32> to vector<16x16xf32>
    %242 = arith.subf %238, %241 : vector<16x16xf32>
    %243 = math.exp %242 : vector<16x16xf32>
    %cst_83 = arith.constant 0.000000e+00 : f32
    %244 = vector.broadcast %cst_83 : f32 to vector<16x16xf32>
    %245 = arith.select %141, %243, %244 : vector<16x16xi1>, vector<16x16xf32>
    %cst_84 = arith.constant dense<0.000000e+00> : vector<16xf32>
    %246 = vector.multi_reduction <add>, %245, %cst_84 [1] : vector<16x16xf32> to vector<16xf32>
    %247 = vector.shape_cast %246 : vector<16xf32> to vector<16x1xf32>
    %248 = tpu.reciprocal %247 {approx = true} : vector<16x1xf32> -> vector<16x1xf32>
    %249 = vector.broadcast %248 : vector<16x1xf32> to vector<16x16xf32>
    %250 = arith.mulf %245, %249 : vector<16x16xf32>
    %251 = vector.extract_strided_slice %137 {offsets = [0, 384], sizes = [16, 128], strides = [1, 1]} : vector<16x512xbf16> to vector<16x128xbf16>
    %252 = arith.truncf %250 : vector<16x16xf32> to vector<16x16xbf16>
    %cst_85 = arith.constant dense<0.000000e+00> : vector<16x128xf32>
    %253 = tpu.matmul %252, %251, %cst_85 {dimension_numbers = #tpu.dot_dimension_numbers<[1], [0], [0], [1], [0, 0, 1, 1], [], []>} : vector<16x16xbf16>, vector<16x128xbf16>, vector<16x128xf32> -> vector<16x128xf32>
    %254 = arith.addf %226, %253 : vector<16x128xf32>
    %cst_86 = arith.constant 2.500000e-01 : f32
    %255 = vector.broadcast %cst_86 : f32 to vector<16x128xf32>
    %256 = arith.mulf %254, %255 : vector<16x128xf32>
    %257 = vector.broadcast %134 : vector<1x128xf32> to vector<16x128xf32>
    %258 = arith.addf %256, %257 : vector<16x128xf32>
    %cst_87 = arith.constant 0.000000e+00 : f32
    %259 = vector.broadcast %cst_87 : f32 to vector<16x128xf32>
    %260 = arith.maximumf %258, %259 : vector<16x128xf32>
    %c0_88 = arith.constant 0 : index
    %c0_89 = arith.constant 0 : index
    %261 = vector.load %arg10[%c0_88, %c0_89] : memref<16x128xf32, #tpu.memory_space<vmem>>, vector<16x128xf32>
    tpu.vector_store %arg10[%c0_88, %c0_89], %260 {strides = array<i32>} : memref<16x128xf32, #tpu.memory_space<vmem>>, vector<16x128xf32>,
    return
  }
}

</mosaic_0001>

<llo_original>
// kernel: gcn_forward.1
$region0: #{gcn_forward.1}
  #allocation0 [shape = 'u32[]', space=smem, size = 0x4, offset = 0x4, fixed_abs, tag = 'smem constant byte address 0x4 - core index']
  #allocation1 [shape = 'u32[72,128]{1,0:T(1,128)}', space=vmem, size = 0x9000, scoped, tag = 'internal scratch']
  %s0 = inlined_call_operand.vmem [shape: bf16[16,8], index: 0, kind: input, shape index: {}]
  %s1 = inlined_call_operand.vmem [shape: f32[16,16], index: 1, kind: input, shape index: {}]
  %s2 = inlined_call_operand.vmem [shape: bf16[8,64], index: 2, kind: input, shape index: {}]
  %s3 = inlined_call_operand.vmem [shape: bf16[4,64], index: 3, kind: input, shape index: {}]
  %s4 = inlined_call_operand.vmem [shape: bf16[64,4], index: 4, kind: input, shape index: {}]
  %s5 = inlined_call_operand.vmem [shape: f32[1,16], index: 5, kind: input, shape index: {}]
  %s6 = inlined_call_operand.vmem [shape: bf16[16,512], index: 6, kind: input, shape index: {}]
  %s7 = inlined_call_operand.vmem [shape: bf16[4,512], index: 7, kind: input, shape index: {}]
  %s8 = inlined_call_operand.vmem [shape: bf16[512,4], index: 8, kind: input, shape index: {}]
  %s9 = inlined_call_operand.vmem [shape: f32[1,128], index: 9, kind: input, shape index: {}]
  %s10 = inlined_call_operand.vmem [shape: f32[16,128], index: 10, kind: output, shape index: {}]
  %s11 = sld [smem:[#allocation0]]
  $region50: #{gcn_forward.1} parent=0
    _
  %s13 = ssub.s32 1, %s11
  %s14 = scalar_select 0, %s13, %s11
  // Predicated region
  $region2: #{gcn_forward.1} parent=0 // pred_check
    _
  $region3: #{gcn_forward.1} parent=0 // pred_check_branch
    %16 = sbr.rel (0) target = $region5
  $region4: #{gcn_forward.1} parent=0 // pred_region
    _
  $region5: #{gcn_forward.1} parent=0 // pred_fallthru
    _
  // Predicated region
  $region6: #{gcn_forward.1} parent=0 // pred_check
    _
  $region7: #{gcn_forward.1} parent=0 // pred_check_branch
    %18 = sbr.rel (0) target = $region9
  $region8: #{gcn_forward.1} parent=0 // pred_region
    _
  $region9: #{gcn_forward.1} parent=0 // pred_fallthru
    _
  // Predicated region
  $region10: #{gcn_forward.1} parent=0 // pred_check
    _
  $region11: #{gcn_forward.1} parent=0 // pred_check_branch
    %20 = sbr.rel (0) target = $region13
  $region12: #{gcn_forward.1} parent=0 // pred_region
    _
  $region13: #{gcn_forward.1} parent=0 // pred_fallthru
    _
  // Predicated region
  $region14: #{gcn_forward.1} parent=0 // pred_check
    _
  $region15: #{gcn_forward.1} parent=0 // pred_check_branch
    %22 = sbr.rel (0) target = $region17
  $region16: #{gcn_forward.1} parent=0 // pred_region
    _
  $region17: #{gcn_forward.1} parent=0 // pred_fallthru
    _
  // Predicated region
  $region18: #{gcn_forward.1} parent=0 // pred_check
    _
  $region19: #{gcn_forward.1} parent=0 // pred_check_branch
    %24 = sbr.rel (0) target = $region21
  $region20: #{gcn_forward.1} parent=0 // pred_region
    _
  $region21: #{gcn_forward.1} parent=0 // pred_fallthru
    _
  // Predicated region
  $region22: #{gcn_forward.1} parent=0 // pred_check
    _
  $region23: #{gcn_forward.1} parent=0 // pred_check_branch
    %26 = sbr.rel (0) target = $region25
  $region24: #{gcn_forward.1} parent=0 // pred_region
    _
  $region25: #{gcn_forward.1} parent=0 // pred_fallthru
    _
  // Predicated region
  $region26: #{gcn_forward.1} parent=0 // pred_check
    _
  $region27: #{gcn_forward.1} parent=0 // pred_check_branch
    %28 = sbr.rel (0) target = $region29
  $region28: #{gcn_forward.1} parent=0 // pred_region
    _
  $region29: #{gcn_forward.1} parent=0 // pred_fallthru
    _
  // Predicated region
  $region30: #{gcn_forward.1} parent=0 // pred_check
    _
  $region31: #{gcn_forward.1} parent=0 // pred_check_branch
    %30 = sbr.rel (0) target = $region33
  $region32: #{gcn_forward.1} parent=0 // pred_region
    _
  $region33: #{gcn_forward.1} parent=0 // pred_fallthru
    _
  // Predicated region
  $region34: #{gcn_forward.1} parent=0 // pred_check
    _
  $region35: #{gcn_forward.1} parent=0 // pred_check_branch
    %32 = sbr.rel (0) target = $region37
  $region36: #{gcn_forward.1} parent=0 // pred_region
    _
  $region37: #{gcn_forward.1} parent=0 // pred_fallthru
    _
  // Predicated region
  $region38: #{gcn_forward.1} parent=0 // pred_check
    _
  $region39: #{gcn_forward.1} parent=0 // pred_check_branch
    %34 = sbr.rel (0) target = $region41
  $region40: #{gcn_forward.1} parent=0 // pred_region
    _
  $region41: #{gcn_forward.1} parent=0 // pred_fallthru
    _
  %v36 = vld [vmem:[%s1] sm:$0xff]
  %v37 = vld [vmem:[%s1 + $0x8] sm:$0xff]
  %v38 = vld [vmem:[%s0] sm:$0xf]
  %v39 = vld [vmem:[%s0 + $0x4] sm:$0xf]
  %v40 = vld [vmem:[%s2] sm:$0xf]
  %v41 = vld [vmem:[%s3] sm:$0x3]
  %v42 = vld [vmem:[%s4] sm:$0xf]
  %v43 = vld [vmem:[%s4 + $0x4] sm:$0xf]
  %v44 = vld [vmem:[%s4 + $0x8] sm:$0xf]
  %v45 = vld [vmem:[%s4 + $0xc] sm:$0xf]
  %v46 = vld [vmem:[%s4 + $0x10] sm:$0xf]
  %v47 = vld [vmem:[%s4 + $0x14] sm:$0xf]
  %v48 = vld [vmem:[%s4 + $0x18] sm:$0xf]
  %v49 = vld [vmem:[%s4 + $0x1c] sm:$0xf]
  %v50 = vld [vmem:[%s5] sm:$0x1]
  %v53 = vunpack.c.l.b16 %v38
  %v54 = vunpack.c.l.b16 %v39
  %v55 = vpack.c.b16 %v54, %v53
  %vm56 = vcmask 64512
  %v58 = vsel %vm56, %v55, 0
  %vm60 = vcmask 1043456
  %v62 = vsel %vm60, %v40, 0
  %64 = vmatpush.bf16.msra.mxu0 0
  %65 = vmatpush.bf16.msra.mxu0 0
  %66 = vmatpush.bf16.msra.mxu0 0
  %67 = vmatpush.bf16.msra.mxu0 0
  %68 = vmatpush.bf16.msra.mxu0 0
  %69 = vmatpush.bf16.msra.mxu0 0
  %70 = vmatpush.bf16.msra.mxu0 0
  %71 = vmatpush.bf16.msra.mxu0 %v62
  %72 = vmatmul.bf16.gmra.mxu0 %v58
  %v73 = vpop.f32.mrf.mxu0
  %v74 = vadd.f32 0.0, %v73
  %v75 = vpop.f32.mrf.mxu0
  %v76 = vadd.f32 0.0, %v75
  %77 = vdwg.mxu0
  %v78 = vpack.c.bf16 %v74, %v74
  %v79 = vpack.c.bf16 %v76, %v76
  %v82 = vunpack.c.l.b16 %v78
  %v83 = vunpack.c.l.b16 %v79
  %v84 = vpack.c.b16 %v83, %v82
  %vm85 = vcmask 523264
  %v87 = vsel %vm85, %v41, 0
  %v90 = vsel %vm85, %v84, 0
  %92 = vmatpush.bf16.xpose.msra.mxu0 0
  %93 = vmatpush.bf16.xpose.msra.mxu0 0
  %94 = vmatpush.bf16.xpose.msra.mxu0 0
  %95 = vmatpush.bf16.xpose.msra.mxu0 0
  %96 = vmatpush.bf16.xpose.msra.mxu0 0
  %97 = vmatpush.bf16.xpose.msra.mxu0 0
  %98 = vmatpush.bf16.xpose.msra.mxu0 0
  %99 = vmatpush.bf16.xpose.msra.mxu0 %v90
  %100 = vmatmul.bf16.gmra.mxu0 %v87
  %v101 = vpop.f32.mrf.mxu0
  %v102 = vadd.f32 0.0, %v101
  %v103 = vpop.f32.mrf.mxu0
  %104 = vdwg.mxu0
  %v113 = vunpack.c.l.b16 %v42
  %v114 = vunpack.c.l.b16 %v43
  %v115 = vunpack.c.l.b16 %v44
  %v116 = vunpack.c.l.b16 %v45
  %v117 = vunpack.c.l.b16 %v46
  %v118 = vunpack.c.l.b16 %v47
  %v119 = vunpack.c.l.b16 %v48
  %v120 = vunpack.c.l.b16 %v49
  %v121 = vpack.c.b16 %v114, %v113
  %v122 = vpack.c.b16 %v116, %v115
  %v123 = vpack.c.b16 %v118, %v117
  %v124 = vpack.c.b16 %v120, %v119
  %129 = vmatpush.bf16.msra.mxu0 0
  %130 = vmatpush.bf16.msra.mxu0 0
  %131 = vmatpush.bf16.msra.mxu0 0
  %132 = vmatpush.bf16.msra.mxu0 0
  %133 = vmatpush.bf16.msra.mxu0 %v124
  %134 = vmatpush.bf16.msra.mxu0 %v123
  %135 = vmatpush.bf16.msra.mxu0 %v122
  %136 = vmatpush.bf16.msra.mxu0 %v121
  %137 = vmatmul.bf16.gmra.mxu0 %v90
  %v138 = vpop.f32.mrf.mxu0
  %v139 = vadd.f32 0.0, %v138
  %v140 = vpop.f32.mrf.mxu0
  %v141 = vadd.f32 0.0, %v140
  %142 = vdwg.mxu0
  %vm143 = vcmp.gt.f32.partialorder %v36, 0.0
  %vm144 = vcmp.gt.f32.partialorder %v37, 0.0
  %146 = vset.pattern.permute.xlu0 0
  %147 = vperm.xlu0 %146, %v139
  %v148 = vpop.permute.xlu0 %147
  %151 = vset.pattern.permute.xlu0 0
  %152 = vperm.xlu0 %151, %v141
  %v153 = vpop.permute.xlu0 %152
  %v155 = vperm.slane %v102, 0
  %v156 = vadd.f32 %v148, %v155
  %v157 = vadd.f32 %v153, %v155
  %vm158 = vcmp.gt.f32.partialorder %v156, 0.0
  %vm159 = vcmp.gt.f32.partialorder %v157, 0.0
  %v160 = vmul.f32 %v156, 0.2
  %v161 = vmul.f32 %v157, 0.2
  %v162 = vsel %vm158, %v156, %v160
  %v163 = vsel %vm159, %v157, %v161
  %v164 = vsel %vm143, %v162, -1e+30
  %v165 = vsel %vm144, %v163, -1e+30
  %vm166 = vcmask 130048
  %v167 = vsel %vm166, %v164, -inf
  %168 = vmax.xlane.f32.xlu0 %v167
  %v169 = vpop.xlane.xlu0 %168
  %v170 = vsel %vm166, %v165, -inf
  %171 = vmax.xlane.f32.xlu0 %v170
  %v172 = vpop.xlane.xlu0 %171
  %v173 = vsub.f32 %v164, %v169
  %v174 = vsub.f32 %v165, %v172
  %v175 = vmul.f32 %v173, 1.442695
  %v176 = vpow.pop %v175
  %v177 = vmul.f32 %v174, 1.442695
  %v178 = vpow.pop %v177
  %v179 = vsel %vm143, %v176, 0.0
  %v180 = vsel %vm144, %v178, 0.0
  %v181 = vsel %vm166, %v179, 0.0
  %182 = vadd.xlane.f32.xlu0 %v181
  %v183 = vpop.xlane.xlu0 %182
  %v184 = vsel %vm166, %v180, 0.0
  %185 = vadd.xlane.f32.xlu0 %v184
  %v186 = vpop.xlane.xlu0 %185
  %v187 = vrcp.pop %v183
  %v188 = vrcp.pop %v186
  %v189 = vmul.f32 %v179, %v187
  %v190 = vmul.f32 %v180, %v188
  %v191 = vpack.c.bf16 %v190, %v189
  %192 = vset.pattern.permute.xlu0 1
  %193 = vperm.xlu0 %192, %v139
  %v194 = vpop.permute.xlu0 %193
  %196 = vset.pattern.permute.xlu0 1
  %197 = vperm.xlu0 %196, %v141
  %v198 = vpop.permute.xlu0 %197
  %v200 = vperm.slane %v102, 1
  %v201 = vadd.f32 %v194, %v200
  %v202 = vadd.f32 %v198, %v200
  %vm203 = vcmp.gt.f32.partialorder %v201, 0.0
  %vm204 = vcmp.gt.f32.partialorder %v202, 0.0
  %v205 = vmul.f32 %v201, 0.2
  %v206 = vmul.f32 %v202, 0.2
  %v207 = vsel %vm203, %v201, %v205
  %v208 = vsel %vm204, %v202, %v206
  %v209 = vsel %vm143, %v207, -1e+30
  %v210 = vsel %vm144, %v208, -1e+30
  %v211 = vsel %vm166, %v209, -inf
  %212 = vmax.xlane.f32.xlu0 %v211
  %v213 = vpop.xlane.xlu0 %212
  %v214 = vsel %vm166, %v210, -inf
  %215 = vmax.xlane.f32.xlu0 %v214
  %v216 = vpop.xlane.xlu0 %215
  %v217 = vsub.f32 %v209, %v213
  %v218 = vsub.f32 %v210, %v216
  %v219 = vmul.f32 %v217, 1.442695
  %v220 = vpow.pop %v219
  %v221 = vmul.f32 %v218, 1.442695
  %v222 = vpow.pop %v221
  %v223 = vsel %vm143, %v220, 0.0
  %v224 = vsel %vm144, %v222, 0.0
  %v225 = vsel %vm166, %v223, 0.0
  %226 = vadd.xlane.f32.xlu0 %v225
  %v227 = vpop.xlane.xlu0 %226
  %v228 = vsel %vm166, %v224, 0.0
  %229 = vadd.xlane.f32.xlu0 %v228
  %v230 = vpop.xlane.xlu0 %229
  %v231 = vrcp.pop %v227
  %v232 = vrcp.pop %v230
  %v233 = vmul.f32 %v223, %v231
  %v234 = vmul.f32 %v224, %v232
  %v235 = vpack.c.bf16 %v234, %v233
  %236 = vrot.lane.b32.xlu0 %v84, 112
  %v237 = vpop.permute.xlu0 %236
  %v240 = vsel %vm166, %v235, 0
  %242 = vmatpush.bf16.msra.mxu0 0
  %243 = vmatpush.bf16.msra.mxu0 0
  %244 = vmatpush.bf16.msra.mxu0 0
  %245 = vmatpush.bf16.msra.mxu0 0
  %246 = vmatpush.bf16.msra.mxu0 0
  %247 = vmatpush.bf16.msra.mxu0 0
  %248 = vmatpush.bf16.msra.mxu0 0
  %249 = vmatpush.bf16.msra.mxu0 %v237
  %250 = vmatmul.bf16.gmra.mxu0 %v240
  %v251 = vpop.f32.mrf.mxu0
  %v252 = vadd.f32 0.0, %v251
  %v253 = vpop.f32.mrf.mxu0
  %v254 = vadd.f32 0.0, %v253
  %255 = vdwg.mxu0
  %v258 = vsel %vm166, %v191, 0
  %260 = vmatpush.bf16.msra.mxu0 0
  %261 = vmatpush.bf16.msra.mxu0 0
  %262 = vmatpush.bf16.msra.mxu0 0
  %263 = vmatpush.bf16.msra.mxu0 0
  %264 = vmatpush.bf16.msra.mxu0 0
  %265 = vmatpush.bf16.msra.mxu0 0
  %266 = vmatpush.bf16.msra.mxu0 0
  %267 = vmatpush.bf16.msra.mxu0 %v84
  %268 = vmatmul.bf16.gmra.mxu0 %v258
  %v269 = vpop.f32.mrf.mxu0
  %v270 = vadd.f32 %v252, %v269
  %v271 = vpop.f32.mrf.mxu0
  %v272 = vadd.f32 %v254, %v271
  %273 = vdwg.mxu0
  %274 = vset.pattern.permute.xlu0 2
  %275 = vperm.xlu0 %274, %v139
  %v276 = vpop.permute.xlu0 %275
  %278 = vset.pattern.permute.xlu0 2
  %279 = vperm.xlu0 %278, %v141
  %v280 = vpop.permute.xlu0 %279
  %v282 = vperm.slane %v102, 2
  %v283 = vadd.f32 %v276, %v282
  %v284 = vadd.f32 %v280, %v282
  %vm285 = vcmp.gt.f32.partialorder %v283, 0.0
  %vm286 = vcmp.gt.f32.partialorder %v284, 0.0
  %v287 = vmul.f32 %v283, 0.2
  %v288 = vmul.f32 %v284, 0.2
  %v289 = vsel %vm285, %v283, %v287
  %v290 = vsel %vm286, %v284, %v288
  %v291 = vsel %vm143, %v289, -1e+30
  %v292 = vsel %vm144, %v290, -1e+30
  %v293 = vsel %vm166, %v291, -inf
  %294 = vmax.xlane.f32.xlu0 %v293
  %v295 = vpop.xlane.xlu0 %294
  %v296 = vsel %vm166, %v292, -inf
  %297 = vmax.xlane.f32.xlu0 %v296
  %v298 = vpop.xlane.xlu0 %297
  %v299 = vsub.f32 %v291, %v295
  %v300 = vsub.f32 %v292, %v298
  %v301 = vmul.f32 %v299, 1.442695
  %v302 = vpow.pop %v301
  %v303 = vmul.f32 %v300, 1.442695
  %v304 = vpow.pop %v303
  %v305 = vsel %vm143, %v302, 0.0
  %v306 = vsel %vm144, %v304, 0.0
  %v307 = vsel %vm166, %v305, 0.0
  %308 = vadd.xlane.f32.xlu0 %v307
  %v309 = vpop.xlane.xlu0 %308
  %v310 = vsel %vm166, %v306, 0.0
  %311 = vadd.xlane.f32.xlu0 %v310
  %v312 = vpop.xlane.xlu0 %311
  %v313 = vrcp.pop %v309
  %v314 = vrcp.pop %v312
  %v315 = vmul.f32 %v305, %v313
  %v316 = vmul.f32 %v306, %v314
  %v317 = vpack.c.bf16 %v316, %v315
  %318 = vrot.lane.b32.xlu0 %v84, 96
  %v319 = vpop.permute.xlu0 %318
  %v322 = vsel %vm166, %v317, 0
  %324 = vmatpush.bf16.msra.mxu0 0
  %325 = vmatpush.bf16.msra.mxu0 0
  %326 = vmatpush.bf16.msra.mxu0 0
  %327 = vmatpush.bf16.msra.mxu0 0
  %328 = vmatpush.bf16.msra.mxu0 0
  %329 = vmatpush.bf16.msra.mxu0 0
  %330 = vmatpush.bf16.msra.mxu0 0
  %331 = vmatpush.bf16.msra.mxu0 %v319
  %332 = vmatmul.bf16.gmra.mxu0 %v322
  %v333 = vpop.f32.mrf.mxu0
  %v334 = vadd.f32 0.0, %v333
  %v335 = vpop.f32.mrf.mxu0
  %v336 = vadd.f32 0.0, %v335
  %337 = vdwg.mxu0
  %v338 = vadd.f32 %v270, %v334
  %v339 = vadd.f32 %v272, %v336
  %340 = vset.pattern.permute.xlu0 3
  %341 = vperm.xlu0 %340, %v139
  %v342 = vpop.permute.xlu0 %341
  %344 = vset.pattern.permute.xlu0 3
  %345 = vperm.xlu0 %344, %v141
  %v346 = vpop.permute.xlu0 %345
  %v348 = vperm.slane %v102, 3
  %v349 = vadd.f32 %v342, %v348
  %v350 = vadd.f32 %v346, %v348
  %vm351 = vcmp.gt.f32.partialorder %v349, 0.0
  %vm352 = vcmp.gt.f32.partialorder %v350, 0.0
  %v353 = vmul.f32 %v349, 0.2
  %v354 = vmul.f32 %v350, 0.2
  %v355 = vsel %vm351, %v349, %v353
  %v356 = vsel %vm352, %v350, %v354
  %v357 = vsel %vm143, %v355, -1e+30
  %v358 = vsel %vm144, %v356, -1e+30
  %v359 = vsel %vm166, %v357, -inf
  %360 = vmax.xlane.f32.xlu0 %v359
  %v361 = vpop.xlane.xlu0 %360
  %v362 = vsel %vm166, %v358, -inf
  %363 = vmax.xlane.f32.xlu0 %v362
  %v364 = vpop.xlane.xlu0 %363
  %v365 = vsub.f32 %v357, %v361
  %v366 = vsub.f32 %v358, %v364
  %v367 = vmul.f32 %v365, 1.442695
  %v368 = vpow.pop %v367
  %v369 = vmul.f32 %v366, 1.442695
  %v370 = vpow.pop %v369
  %v371 = vsel %vm143, %v368, 0.0
  %v372 = vsel %vm144, %v370, 0.0
  %v373 = vsel %vm166, %v371, 0.0
  %374 = vadd.xlane.f32.xlu0 %v373
  %v375 = vpop.xlane.xlu0 %374
  %v376 = vsel %vm166, %v372, 0.0
  %377 = vadd.xlane.f32.xlu0 %v376
  %v378 = vpop.xlane.xlu0 %377
  %v379 = vrcp.pop %v375
  %v380 = vrcp.pop %v378
  %v381 = vmul.f32 %v371, %v379
  %v382 = vmul.f32 %v372, %v380
  %v383 = vpack.c.bf16 %v382, %v381
  %384 = vrot.lane.b32.xlu0 %v84, 80
  %v385 = vpop.permute.xlu0 %384
  %v388 = vsel %vm166, %v383, 0
  %390 = vmatpush.bf16.msra.mxu0 0
  %391 = vmatpush.bf16.msra.mxu0 0
  %392 = vmatpush.bf16.msra.mxu0 0
  %393 = vmatpush.bf16.msra.mxu0 0
  %394 = vmatpush.bf16.msra.mxu0 0
  %395 = vmatpush.bf16.msra.mxu0 0
  %396 = vmatpush.bf16.msra.mxu0 0
  %397 = vmatpush.bf16.msra.mxu0 %v385
  %398 = vmatmul.bf16.gmra.mxu0 %v388
  %v399 = vpop.f32.mrf.mxu0
  %v400 = vadd.f32 0.0, %v399
  %v401 = vpop.f32.mrf.mxu0
  %v402 = vadd.f32 0.0, %v401
  %403 = vdwg.mxu0
  %v404 = vadd.f32 %v338, %v400
  %v405 = vadd.f32 %v339, %v402
  %v406 = vmul.f32 %v404, 0.25
  %v407 = vmul.f32 %v405, 0.25
  %v409 = vperm.slane %v50, 0
  %v411 = vadd.f32 %v406, %v409
  %v412 = vadd.f32 %v407, %v409
  %v413 = vmax.f32 %v411, 0.0
  %v414 = vmax.f32 %v412, 0.0
  %v415 = vld [vmem:[%s6] sm:$0xff]
  %v416 = vld [vmem:[%s6 + $0x8] sm:$0xff]
  %v417 = vld [vmem:[%s6 + $0x10] sm:$0xff]
  %v418 = vld [vmem:[%s6 + $0x18] sm:$0xff]
  %v419 = vld [vmem:[%s7] sm:$0xff]
  %v420 = vld [vmem:[%s8] sm:$0xf]
  %v421 = vld [vmem:[%s8 + $0x4] sm:$0xf]
  %v422 = vld [vmem:[%s8 + $0x8] sm:$0xf]
  %v423 = vld [vmem:[%s8 + $0xc] sm:$0xf]
  %v424 = vld [vmem:[%s8 + $0x10] sm:$0xf]
  %v425 = vld [vmem:[%s8 + $0x14] sm:$0xf]
  %v426 = vld [vmem:[%s8 + $0x18] sm:$0xf]
  %v427 = vld [vmem:[%s8 + $0x1c] sm:$0xf]
  %v428 = vld [vmem:[%s8 + $0x20] sm:$0xf]
  %v429 = vld [vmem:[%s8 + $0x24] sm:$0xf]
  %v430 = vld [vmem:[%s8 + $0x28] sm:$0xf]
  %v431 = vld [vmem:[%s8 + $0x2c] sm:$0xf]
  %v432 = vld [vmem:[%s8 + $0x30] sm:$0xf]
  %v433 = vld [vmem:[%s8 + $0x34] sm:$0xf]
  %v434 = vld [vmem:[%s8 + $0x38] sm:$0xf]
  %v435 = vld [vmem:[%s8 + $0x3c] sm:$0xf]
  %v436 = vld [vmem:[%s8 + $0x40] sm:$0xf]
  %v437 = vld [vmem:[%s8 + $0x44] sm:$0xf]
  %v438 = vld [vmem:[%s8 + $0x48] sm:$0xf]
  %v439 = vld [vmem:[%s8 + $0x4c] sm:$0xf]
  %v440 = vld [vmem:[%s8 + $0x50] sm:$0xf]
  %v441 = vld [vmem:[%s8 + $0x54] sm:$0xf]
  %v442 = vld [vmem:[%s8 + $0x58] sm:$0xf]
  %v443 = vld [vmem:[%s8 + $0x5c] sm:$0xf]
  %v444 = vld [vmem:[%s8 + $0x60] sm:$0xf]
  %v445 = vld [vmem:[%s8 + $0x64] sm:$0xf]
  %v446 = vld [vmem:[%s8 + $0x68] sm:$0xf]
  %v447 = vld [vmem:[%s8 + $0x6c] sm:$0xf]
  %v448 = vld [vmem:[%s8 + $0x70] sm:$0xf]
  %v449 = vld [vmem:[%s8 + $0x74] sm:$0xf]
  %v450 = vld [vmem:[%s8 + $0x78] sm:$0xf]
  %v451 = vld [vmem:[%s8 + $0x7c] sm:$0xf]
  %v452 = vld [vmem:[%s8 + $0x80] sm:$0xf]
  %v453 = vld [vmem:[%s8 + $0x84] sm:$0xf]
  %v454 = vld [vmem:[%s8 + $0x88] sm:$0xf]
  %v455 = vld [vmem:[%s8 + $0x8c] sm:$0xf]
  %v456 = vld [vmem:[%s8 + $0x90] sm:$0xf]
  %v457 = vld [vmem:[%s8 + $0x94] sm:$0xf]
  %v458 = vld [vmem:[%s8 + $0x98] sm:$0xf]
  %v459 = vld [vmem:[%s8 + $0x9c] sm:$0xf]
  %v460 = vld [vmem:[%s8 + $0xa0] sm:$0xf]
  %v461 = vld [vmem:[%s8 + $0xa4] sm:$0xf]
  %v462 = vld [vmem:[%s8 + $0xa8] sm:$0xf]
  %v463 = vld [vmem:[%s8 + $0xac] sm:$0xf]
  %v464 = vld [vmem:[%s8 + $0xb0] sm:$0xf]
  %v465 = vld [vmem:[%s8 + $0xb4] sm:$0xf]
  %v466 = vld [vmem:[%s8 + $0xb8] sm:$0xf]
  %v467 = vld [vmem:[%s8 + $0xbc] sm:$0xf]
  %v468 = vld [vmem:[%s8 + $0xc0] sm:$0xf]
  %v469 = vld [vmem:[%s8 + $0xc4] sm:$0xf]
  %v470 = vld [vmem:[%s8 + $0xc8] sm:$0xf]
  %v471 = vld [vmem:[%s8 + $0xcc] sm:$0xf]
  %v472 = vld [vmem:[%s8 + $0xd0] sm:$0xf]
  %v473 = vld [vmem:[%s8 + $0xd4] sm:$0xf]
  %v474 = vld [vmem:[%s8 + $0xd8] sm:$0xf]
  %v475 = vld [vmem:[%s8 + $0xdc] sm:$0xf]
  %v476 = vld [vmem:[%s8 + $0xe0] sm:$0xf]
  %v477 = vld [vmem:[%s8 + $0xe4] sm:$0xf]
  %v478 = vld [vmem:[%s8 + $0xe8] sm:$0xf]
  %v479 = vld [vmem:[%s8 + $0xec] sm:$0xf]
  %v480 = vld [vmem:[%s8 + $0xf0] sm:$0xf]
  %v481 = vld [vmem:[%s8 + $0xf4] sm:$0xf]
  %v482 = vld [vmem:[%s8 + $0xf8] sm:$0xf]
  %v483 = vld [vmem:[%s8 + $0xfc] sm:$0xf]
  %v484 = vld [vmem:[%s9] sm:$0x1]
  %v485 = vpack.c.bf16 %v414, %v413
  %v490 = vunpack.c.l.b16 %v415
  %v491 = vunpack.c.h.b16 %v415
  %v492 = vunpack.c.l.b16 %v416
  %v493 = vunpack.c.h.b16 %v416
  %v494 = vunpack.c.l.b16 %v417
  %v495 = vunpack.c.h.b16 %v417
  %v496 = vunpack.c.l.b16 %v418
  %v497 = vunpack.c.h.b16 %v418
  %v498 = vpack.c.b16 %v494, %v490
  %v499 = vpack.c.b16 %v495, %v491
  %v500 = vpack.c.b16 %v496, %v492
  %v501 = vpack.c.b16 %v497, %v493
  %v507 = vsel %vm166, %v485, 0
  %509 = vmatpush.bf16.msra.mxu0 0
  %510 = vmatpush.bf16.msra.mxu0 0
  %511 = vmatpush.bf16.msra.mxu0 0
  %512 = vmatpush.bf16.msra.mxu0 0
  %513 = vmatpush.bf16.msra.mxu0 0
  %514 = vmatpush.bf16.msra.mxu0 0
  %515 = vmatpush.bf16.msra.mxu0 0
  %516 = vmatpush.bf16.msra.mxu0 %v498
  %517 = vmatmul.bf16.gmra.mxu0 %v507
  %v518 = vpop.f32.mrf.mxu0
  %v519 = vadd.f32 0.0, %v518
  %v520 = vpop.f32.mrf.mxu0
  %v521 = vadd.f32 0.0, %v520
  %522 = vdwg.mxu0
  %523 = vmatpush.bf16.msra.mxu0 0
  %524 = vmatpush.bf16.msra.mxu0 0
  %525 = vmatpush.bf16.msra.mxu0 0
  %526 = vmatpush.bf16.msra.mxu0 0
  %527 = vmatpush.bf16.msra.mxu0 0
  %528 = vmatpush.bf16.msra.mxu0 0
  %529 = vmatpush.bf16.msra.mxu0 0
  %530 = vmatpush.bf16.msra.mxu0 %v499
  %531 = vmatmul.bf16.gmra.mxu0 %v507
  %v532 = vpop.f32.mrf.mxu0
  %v533 = vadd.f32 0.0, %v532
  %v534 = vpop.f32.mrf.mxu0
  %v535 = vadd.f32 0.0, %v534
  %536 = vdwg.mxu0
  %537 = vmatpush.bf16.msra.mxu0 0
  %538 = vmatpush.bf16.msra.mxu0 0
  %539 = vmatpush.bf16.msra.mxu0 0
  %540 = vmatpush.bf16.msra.mxu0 0
  %541 = vmatpush.bf16.msra.mxu0 0
  %542 = vmatpush.bf16.msra.mxu0 0
  %543 = vmatpush.bf16.msra.mxu0 0
  %544 = vmatpush.bf16.msra.mxu0 %v500
  %545 = vmatmul.bf16.gmra.mxu0 %v507
  %v546 = vpop.f32.mrf.mxu0
  %v547 = vadd.f32 0.0, %v546
  %v548 = vpop.f32.mrf.mxu0
  %v549 = vadd.f32 0.0, %v548
  %550 = vdwg.mxu0
  %551 = vmatpush.bf16.msra.mxu0 0
  %552 = vmatpush.bf16.msra.mxu0 0
  %553 = vmatpush.bf16.msra.mxu0 0
  %554 = vmatpush.bf16.msra.mxu0 0
  %555 = vmatpush.bf16.msra.mxu0 0
  %556 = vmatpush.bf16.msra.mxu0 0
  %557 = vmatpush.bf16.msra.mxu0 0
  %558 = vmatpush.bf16.msra.mxu0 %v501
  %559 = vmatmul.bf16.gmra.mxu0 %v507
  %v560 = vpop.f32.mrf.mxu0
  %v561 = vadd.f32 0.0, %v560
  %v562 = vpop.f32.mrf.mxu0
  %v563 = vadd.f32 0.0, %v562
  %564 = vdwg.mxu0
  %v565 = vpack.c.bf16 %v533, %v519
  %v566 = vpack.c.bf16 %v561, %v547
  %v567 = vpack.c.bf16 %v535, %v521
  %v568 = vpack.c.bf16 %v563, %v549
  %570 = vst [vmem:[#allocation1] ss:$4 sm:$0xff] %v419
  %v571 = vld.sshfl [vmem:[#allocation1] sm:$0xff pattern:$0x73625140]
  %v572 = vld.sshfl [vmem:[#allocation1 + $0x8] sm:$0xff pattern:$0x73625140]
  %v573 = vld.sshfl [vmem:[#allocation1 + $0x10] sm:$0xff pattern:$0x73625140]
  %v574 = vld.sshfl [vmem:[#allocation1 + $0x18] sm:$0xff pattern:$0x73625140]
  %v583 = vunpack.c.l.b16 %v565
  %v584 = vunpack.c.h.b16 %v565
  %v585 = vunpack.c.l.b16 %v566
  %v586 = vunpack.c.h.b16 %v566
  %v587 = vunpack.c.l.b16 %v567
  %v588 = vunpack.c.h.b16 %v567
  %v589 = vunpack.c.l.b16 %v568
  %v590 = vunpack.c.h.b16 %v568
  %v591 = vpack.c.b16 %v587, %v583
  %v592 = vpack.c.b16 %v588, %v584
  %v593 = vpack.c.b16 %v589, %v585
  %v594 = vpack.c.b16 %v590, %v586
  %599 = vmatpush.bf16.xpose.msra.mxu0 0
  %600 = vmatpush.bf16.xpose.msra.mxu0 0
  %601 = vmatpush.bf16.xpose.msra.mxu0 0
  %602 = vmatpush.bf16.xpose.msra.mxu0 0
  %603 = vmatpush.bf16.xpose.msra.mxu0 0
  %604 = vmatpush.bf16.xpose.msra.mxu0 0
  %605 = vmatpush.bf16.xpose.msra.mxu0 0
  %606 = vmatpush.bf16.xpose.msra.mxu0 %v591
  %607 = vmatmul.bf16.gmra.mxu0 %v571
  %v608 = vpop.f32.mrf.mxu0
  %v609 = vadd.f32 0.0, %v608
  %v610 = vpop.f32.mrf.mxu0
  %611 = vdwg.mxu0
  %612 = vmatpush.bf16.xpose.msra.mxu0 0
  %613 = vmatpush.bf16.xpose.msra.mxu0 0
  %614 = vmatpush.bf16.xpose.msra.mxu0 0
  %615 = vmatpush.bf16.xpose.msra.mxu0 0
  %616 = vmatpush.bf16.xpose.msra.mxu0 0
  %617 = vmatpush.bf16.xpose.msra.mxu0 0
  %618 = vmatpush.bf16.xpose.msra.mxu0 0
  %619 = vmatpush.bf16.xpose.msra.mxu0 %v592
  %620 = vmatmul.bf16.gmra.mxu0 %v572
  %v621 = vpop.f32.mrf.mxu0
  %v622 = vadd.f32 %v609, %v621
  %v623 = vpop.f32.mrf.mxu0
  %624 = vdwg.mxu0
  %625 = vmatpush.bf16.xpose.msra.mxu0 0
  %626 = vmatpush.bf16.xpose.msra.mxu0 0
  %627 = vmatpush.bf16.xpose.msra.mxu0 0
  %628 = vmatpush.bf16.xpose.msra.mxu0 0
  %629 = vmatpush.bf16.xpose.msra.mxu0 0
  %630 = vmatpush.bf16.xpose.msra.mxu0 0
  %631 = vmatpush.bf16.xpose.msra.mxu0 0
  %632 = vmatpush.bf16.xpose.msra.mxu0 %v593
  %633 = vmatmul.bf16.gmra.mxu0 %v573
  %v634 = vpop.f32.mrf.mxu0
  %v635 = vadd.f32 %v622, %v634
  %v636 = vpop.f32.mrf.mxu0
  %637 = vdwg.mxu0
  %638 = vmatpush.bf16.xpose.msra.mxu0 0
  %639 = vmatpush.bf16.xpose.msra.mxu0 0
  %640 = vmatpush.bf16.xpose.msra.mxu0 0
  %641 = vmatpush.bf16.xpose.msra.mxu0 0
  %642 = vmatpush.bf16.xpose.msra.mxu0 0
  %643 = vmatpush.bf16.xpose.msra.mxu0 0
  %644 = vmatpush.bf16.xpose.msra.mxu0 0
  %645 = vmatpush.bf16.xpose.msra.mxu0 %v594
  %646 = vmatmul.bf16.gmra.mxu0 %v574
  %v647 = vpop.f32.mrf.mxu0
  %v648 = vadd.f32 %v635, %v647
  %v649 = vpop.f32.mrf.mxu0
  %650 = vdwg.mxu0
  %v715 = vunpack.c.l.b16 %v420
  %v716 = vunpack.c.l.b16 %v421
  %v717 = vunpack.c.l.b16 %v422
  %v718 = vunpack.c.l.b16 %v423
  %v719 = vunpack.c.l.b16 %v424
  %v720 = vunpack.c.l.b16 %v425
  %v721 = vunpack.c.l.b16 %v426
  %v722 = vunpack.c.l.b16 %v427
  %v723 = vunpack.c.l.b16 %v428
  %v724 = vunpack.c.l.b16 %v429
  %v725 = vunpack.c.l.b16 %v430
  %v726 = vunpack.c.l.b16 %v431
  %v727 = vunpack.c.l.b16 %v432
  %v728 = vunpack.c.l.b16 %v433
  %v729 = vunpack.c.l.b16 %v434
  %v730 = vunpack.c.l.b16 %v435
  %v731 = vunpack.c.l.b16 %v436
  %v732 = vunpack.c.l.b16 %v437
  %v733 = vunpack.c.l.b16 %v438
  %v734 = vunpack.c.l.b16 %v439
  %v735 = vunpack.c.l.b16 %v440
  %v736 = vunpack.c.l.b16 %v441
  %v737 = vunpack.c.l.b16 %v442
  %v738 = vunpack.c.l.b16 %v443
  %v739 = vunpack.c.l.b16 %v444
  %v740 = vunpack.c.l.b16 %v445
  %v741 = vunpack.c.l.b16 %v446
  %v742 = vunpack.c.l.b16 %v447
  %v743 = vunpack.c.l.b16 %v448
  %v744 = vunpack.c.l.b16 %v449
  %v745 = vunpack.c.l.b16 %v450
  %v746 = vunpack.c.l.b16 %v451
  %v747 = vunpack.c.l.b16 %v452
  %v748 = vunpack.c.l.b16 %v453
  %v749 = vunpack.c.l.b16 %v454
  %v750 = vunpack.c.l.b16 %v455
  %v751 = vunpack.c.l.b16 %v456
  %v752 = vunpack.c.l.b16 %v457
  %v753 = vunpack.c.l.b16 %v458
  %v754 = vunpack.c.l.b16 %v459
  %v755 = vunpack.c.l.b16 %v460
  %v756 = vunpack.c.l.b16 %v461
  %v757 = vunpack.c.l.b16 %v462
  %v758 = vunpack.c.l.b16 %v463
  %v759 = vunpack.c.l.b16 %v464
  %v760 = vunpack.c.l.b16 %v465
  %v761 = vunpack.c.l.b16 %v466
  %v762 = vunpack.c.l.b16 %v467
  %v763 = vunpack.c.l.b16 %v468
  %v764 = vunpack.c.l.b16 %v469
  %v765 = vunpack.c.l.b16 %v470
  %v766 = vunpack.c.l.b16 %v471
  %v767 = vunpack.c.l.b16 %v472
  %v768 = vunpack.c.l.b16 %v473
  %v769 = vunpack.c.l.b16 %v474
  %v770 = vunpack.c.l.b16 %v475
  %v771 = vunpack.c.l.b16 %v476
  %v772 = vunpack.c.l.b16 %v477
  %v773 = vunpack.c.l.b16 %v478
  %v774 = vunpack.c.l.b16 %v479
  %v775 = vunpack.c.l.b16 %v480
  %v776 = vunpack.c.l.b16 %v481
  %v777 = vunpack.c.l.b16 %v482
  %v778 = vunpack.c.l.b16 %v483
  %v779 = vpack.c.b16 %v716, %v715
  %v780 = vpack.c.b16 %v718, %v717
  %v781 = vpack.c.b16 %v720, %v719
  %v782 = vpack.c.b16 %v722, %v721
  %v783 = vpack.c.b16 %v724, %v723
  %v784 = vpack.c.b16 %v726, %v725
  %v785 = vpack.c.b16 %v728, %v727
  %v786 = vpack.c.b16 %v730, %v729
  %v787 = vpack.c.b16 %v732, %v731
  %v788 = vpack.c.b16 %v734, %v733
  %v789 = vpack.c.b16 %v736, %v735
  %v790 = vpack.c.b16 %v738, %v737
  %v791 = vpack.c.b16 %v740, %v739
  %v792 = vpack.c.b16 %v742, %v741
  %v793 = vpack.c.b16 %v744, %v743
  %v794 = vpack.c.b16 %v746, %v745
  %v795 = vpack.c.b16 %v748, %v747
  %v796 = vpack.c.b16 %v750, %v749
  %v797 = vpack.c.b16 %v752, %v751
  %v798 = vpack.c.b16 %v754, %v753
  %v799 = vpack.c.b16 %v756, %v755
  %v800 = vpack.c.b16 %v758, %v757
  %v801 = vpack.c.b16 %v760, %v759
  %v802 = vpack.c.b16 %v762, %v761
  %v803 = vpack.c.b16 %v764, %v763
  %v804 = vpack.c.b16 %v766, %v765
  %v805 = vpack.c.b16 %v768, %v767
  %v806 = vpack.c.b16 %v770, %v769
  %v807 = vpack.c.b16 %v772, %v771
  %v808 = vpack.c.b16 %v774, %v773
  %v809 = vpack.c.b16 %v776, %v775
  %v810 = vpack.c.b16 %v778, %v777
  %843 = vmatpush.bf16.msra.mxu0 %v786
  %844 = vmatpush.bf16.msra.mxu0 %v785
  %845 = vmatpush.bf16.msra.mxu0 %v784
  %846 = vmatpush.bf16.msra.mxu0 %v783
  %847 = vmatpush.bf16.msra.mxu0 %v782
  %848 = vmatpush.bf16.msra.mxu0 %v781
  %849 = vmatpush.bf16.msra.mxu0 %v780
  %850 = vmatpush.bf16.msra.mxu0 %v779
  %851 = vmatmul.bf16.gmra.mxu0 %v591
  %v852 = vpop.f32.mrf.mxu0
  %v853 = vadd.f32 0.0, %v852
  %v854 = vpop.f32.mrf.mxu0
  %v855 = vadd.f32 0.0, %v854
  %856 = vdwg.mxu0
  %857 = vmatpush.bf16.msra.mxu0 %v794
  %858 = vmatpush.bf16.msra.mxu0 %v793
  %859 = vmatpush.bf16.msra.mxu0 %v792
  %860 = vmatpush.bf16.msra.mxu0 %v791
  %861 = vmatpush.bf16.msra.mxu0 %v790
  %862 = vmatpush.bf16.msra.mxu0 %v789
  %863 = vmatpush.bf16.msra.mxu0 %v788
  %864 = vmatpush.bf16.msra.mxu0 %v787
  %865 = vmatmul.bf16.gmra.mxu0 %v592
  %v866 = vpop.f32.mrf.mxu0
  %v867 = vadd.f32 %v853, %v866
  %v868 = vpop.f32.mrf.mxu0
  %v869 = vadd.f32 %v855, %v868
  %870 = vdwg.mxu0
  %871 = vmatpush.bf16.msra.mxu0 %v802
  %872 = vmatpush.bf16.msra.mxu0 %v801
  %873 = vmatpush.bf16.msra.mxu0 %v800
  %874 = vmatpush.bf16.msra.mxu0 %v799
  %875 = vmatpush.bf16.msra.mxu0 %v798
  %876 = vmatpush.bf16.msra.mxu0 %v797
  %877 = vmatpush.bf16.msra.mxu0 %v796
  %878 = vmatpush.bf16.msra.mxu0 %v795
  %879 = vmatmul.bf16.gmra.mxu0 %v593
  %v880 = vpop.f32.mrf.mxu0
  %v881 = vadd.f32 %v867, %v880
  %v882 = vpop.f32.mrf.mxu0
  %v883 = vadd.f32 %v869, %v882
  %884 = vdwg.mxu0
  %885 = vmatpush.bf16.msra.mxu0 %v810
  %886 = vmatpush.bf16.msra.mxu0 %v809
  %887 = vmatpush.bf16.msra.mxu0 %v808
  %888 = vmatpush.bf16.msra.mxu0 %v807
  %889 = vmatpush.bf16.msra.mxu0 %v806
  %890 = vmatpush.bf16.msra.mxu0 %v805
  %891 = vmatpush.bf16.msra.mxu0 %v804
  %892 = vmatpush.bf16.msra.mxu0 %v803
  %893 = vmatmul.bf16.gmra.mxu0 %v594
  %v894 = vpop.f32.mrf.mxu0
  %v895 = vadd.f32 %v881, %v894
  %v896 = vpop.f32.mrf.mxu0
  %v897 = vadd.f32 %v883, %v896
  %898 = vdwg.mxu0
  %900 = vset.pattern.permute.xlu0 0
  %901 = vperm.xlu0 %900, %v895
  %v902 = vpop.permute.xlu0 %901
  %905 = vset.pattern.permute.xlu0 0
  %906 = vperm.xlu0 %905, %v897
  %v907 = vpop.permute.xlu0 %906
  %v909 = vperm.slane %v648, 0
  %v910 = vadd.f32 %v902, %v909
  %v911 = vadd.f32 %v907, %v909
  %vm912 = vcmp.gt.f32.partialorder %v910, 0.0
  %vm913 = vcmp.gt.f32.partialorder %v911, 0.0
  %v914 = vmul.f32 %v910, 0.2
  %v915 = vmul.f32 %v911, 0.2
  %v916 = vsel %vm912, %v910, %v914
  %v917 = vsel %vm913, %v911, %v915
  %v918 = vsel %vm143, %v916, -1e+30
  %v919 = vsel %vm144, %v917, -1e+30
  %v920 = vsel %vm166, %v918, -inf
  %921 = vmax.xlane.f32.xlu0 %v920
  %v922 = vpop.xlane.xlu0 %921
  %v923 = vsel %vm166, %v919, -inf
  %924 = vmax.xlane.f32.xlu0 %v923
  %v925 = vpop.xlane.xlu0 %924
  %v926 = vsub.f32 %v918, %v922
  %v927 = vsub.f32 %v919, %v925
  %v928 = vmul.f32 %v926, 1.442695
  %v929 = vpow.pop %v928
  %v930 = vmul.f32 %v927, 1.442695
  %v931 = vpow.pop %v930
  %v932 = vsel %vm143, %v929, 0.0
  %v933 = vsel %vm144, %v931, 0.0
  %v934 = vsel %vm166, %v932, 0.0
  %935 = vadd.xlane.f32.xlu0 %v934
  %v936 = vpop.xlane.xlu0 %935
  %v937 = vsel %vm166, %v933, 0.0
  %938 = vadd.xlane.f32.xlu0 %v937
  %v939 = vpop.xlane.xlu0 %938
  %v940 = vrcp.pop %v936
  %v941 = vrcp.pop %v939
  %v942 = vmul.f32 %v932, %v940
  %v943 = vmul.f32 %v933, %v941
  %v944 = vpack.c.bf16 %v943, %v942
  %945 = vset.pattern.permute.xlu0 1
  %946 = vperm.xlu0 %945, %v895
  %v947 = vpop.permute.xlu0 %946
  %949 = vset.pattern.permute.xlu0 1
  %950 = vperm.xlu0 %949, %v897
  %v951 = vpop.permute.xlu0 %950
  %v953 = vperm.slane %v648, 1
  %v954 = vadd.f32 %v947, %v953
  %v955 = vadd.f32 %v951, %v953
  %vm956 = vcmp.gt.f32.partialorder %v954, 0.0
  %vm957 = vcmp.gt.f32.partialorder %v955, 0.0
  %v958 = vmul.f32 %v954, 0.2
  %v959 = vmul.f32 %v955, 0.2
  %v960 = vsel %vm956, %v954, %v958
  %v961 = vsel %vm957, %v955, %v959
  %v962 = vsel %vm143, %v960, -1e+30
  %v963 = vsel %vm144, %v961, -1e+30
  %v964 = vsel %vm166, %v962, -inf
  %965 = vmax.xlane.f32.xlu0 %v964
  %v966 = vpop.xlane.xlu0 %965
  %v967 = vsel %vm166, %v963, -inf
  %968 = vmax.xlane.f32.xlu0 %v967
  %v969 = vpop.xlane.xlu0 %968
  %v970 = vsub.f32 %v962, %v966
  %v971 = vsub.f32 %v963, %v969
  %v972 = vmul.f32 %v970, 1.442695
  %v973 = vpow.pop %v972
  %v974 = vmul.f32 %v971, 1.442695
  %v975 = vpow.pop %v974
  %v976 = vsel %vm143, %v973, 0.0
  %v977 = vsel %vm144, %v975, 0.0
  %v978 = vsel %vm166, %v976, 0.0
  %979 = vadd.xlane.f32.xlu0 %v978
  %v980 = vpop.xlane.xlu0 %979
  %v981 = vsel %vm166, %v977, 0.0
  %982 = vadd.xlane.f32.xlu0 %v981
  %v983 = vpop.xlane.xlu0 %982
  %v984 = vrcp.pop %v980
  %v985 = vrcp.pop %v983
  %v986 = vmul.f32 %v976, %v984
  %v987 = vmul.f32 %v977, %v985
  %v988 = vpack.c.bf16 %v987, %v986
  %v990 = vsel %vm166, %v988, 0
  %992 = vmatpush.bf16.msra.mxu0 0
  %993 = vmatpush.bf16.msra.mxu0 0
  %994 = vmatpush.bf16.msra.mxu0 0
  %995 = vmatpush.bf16.msra.mxu0 0
  %996 = vmatpush.bf16.msra.mxu0 0
  %997 = vmatpush.bf16.msra.mxu0 0
  %998 = vmatpush.bf16.msra.mxu0 0
  %999 = vmatpush.bf16.msra.mxu0 %v592
  %1000 = vmatmul.bf16.gmra.mxu0 %v990
  %v1001 = vpop.f32.mrf.mxu0
  %v1002 = vadd.f32 0.0, %v1001
  %v1003 = vpop.f32.mrf.mxu0
  %v1004 = vadd.f32 0.0, %v1003
  %1005 = vdwg.mxu0
  %v1007 = vsel %vm166, %v944, 0
  %1009 = vmatpush.bf16.msra.mxu0 0
  %1010 = vmatpush.bf16.msra.mxu0 0
  %1011 = vmatpush.bf16.msra.mxu0 0
  %1012 = vmatpush.bf16.msra.mxu0 0
  %1013 = vmatpush.bf16.msra.mxu0 0
  %1014 = vmatpush.bf16.msra.mxu0 0
  %1015 = vmatpush.bf16.msra.mxu0 0
  %1016 = vmatpush.bf16.msra.mxu0 %v591
  %1017 = vmatmul.bf16.gmra.mxu0 %v1007
  %v1018 = vpop.f32.mrf.mxu0
  %v1019 = vadd.f32 %v1002, %v1018
  %v1020 = vpop.f32.mrf.mxu0
  %v1021 = vadd.f32 %v1004, %v1020
  %1022 = vdwg.mxu0
  %1023 = vset.pattern.permute.xlu0 2
  %1024 = vperm.xlu0 %1023, %v895
  %v1025 = vpop.permute.xlu0 %1024
  %1027 = vset.pattern.permute.xlu0 2
  %1028 = vperm.xlu0 %1027, %v897
  %v1029 = vpop.permute.xlu0 %1028
  %v1031 = vperm.slane %v648, 2
  %v1032 = vadd.f32 %v1025, %v1031
  %v1033 = vadd.f32 %v1029, %v1031
  %vm1034 = vcmp.gt.f32.partialorder %v1032, 0.0
  %vm1035 = vcmp.gt.f32.partialorder %v1033, 0.0
  %v1036 = vmul.f32 %v1032, 0.2
  %v1037 = vmul.f32 %v1033, 0.2
  %v1038 = vsel %vm1034, %v1032, %v1036
  %v1039 = vsel %vm1035, %v1033, %v1037
  %v1040 = vsel %vm143, %v1038, -1e+30
  %v1041 = vsel %vm144, %v1039, -1e+30
  %v1042 = vsel %vm166, %v1040, -inf
  %1043 = vmax.xlane.f32.xlu0 %v1042
  %v1044 = vpop.xlane.xlu0 %1043
  %v1045 = vsel %vm166, %v1041, -inf
  %1046 = vmax.xlane.f32.xlu0 %v1045
  %v1047 = vpop.xlane.xlu0 %1046
  %v1048 = vsub.f32 %v1040, %v1044
  %v1049 = vsub.f32 %v1041, %v1047
  %v1050 = vmul.f32 %v1048, 1.442695
  %v1051 = vpow.pop %v1050
  %v1052 = vmul.f32 %v1049, 1.442695
  %v1053 = vpow.pop %v1052
  %v1054 = vsel %vm143, %v1051, 0.0
  %v1055 = vsel %vm144, %v1053, 0.0
  %v1056 = vsel %vm166, %v1054, 0.0
  %1057 = vadd.xlane.f32.xlu0 %v1056
  %v1058 = vpop.xlane.xlu0 %1057
  %v1059 = vsel %vm166, %v1055, 0.0
  %1060 = vadd.xlane.f32.xlu0 %v1059
  %v1061 = vpop.xlane.xlu0 %1060
  %v1062 = vrcp.pop %v1058
  %v1063 = vrcp.pop %v1061
  %v1064 = vmul.f32 %v1054, %v1062
  %v1065 = vmul.f32 %v1055, %v1063
  %v1066 = vpack.c.bf16 %v1065, %v1064
  %v1068 = vsel %vm166, %v1066, 0
  %1070 = vmatpush.bf16.msra.mxu0 0
  %1071 = vmatpush.bf16.msra.mxu0 0
  %1072 = vmatpush.bf16.msra.mxu0 0
  %1073 = vmatpush.bf16.msra.mxu0 0
  %1074 = vmatpush.bf16.msra.mxu0 0
  %1075 = vmatpush.bf16.msra.mxu0 0
  %1076 = vmatpush.bf16.msra.mxu0 0
  %1077 = vmatpush.bf16.msra.mxu0 %v593
  %1078 = vmatmul.bf16.gmra.mxu0 %v1068
  %v1079 = vpop.f32.mrf.mxu0
  %v1080 = vadd.f32 0.0, %v1079
  %v1081 = vpop.f32.mrf.mxu0
  %v1082 = vadd.f32 0.0, %v1081
  %1083 = vdwg.mxu0
  %v1084 = vadd.f32 %v1019, %v1080
  %v1085 = vadd.f32 %v1021, %v1082
  %1086 = vset.pattern.permute.xlu0 3
  %1087 = vperm.xlu0 %1086, %v895
  %v1088 = vpop.permute.xlu0 %1087
  %1090 = vset.pattern.permute.xlu0 3
  %1091 = vperm.xlu0 %1090, %v897
  %v1092 = vpop.permute.xlu0 %1091
  %v1094 = vperm.slane %v648, 3
  %v1095 = vadd.f32 %v1088, %v1094
  %v1096 = vadd.f32 %v1092, %v1094
  %vm1097 = vcmp.gt.f32.partialorder %v1095, 0.0
  %vm1098 = vcmp.gt.f32.partialorder %v1096, 0.0
  %v1099 = vmul.f32 %v1095, 0.2
  %v1100 = vmul.f32 %v1096, 0.2
  %v1101 = vsel %vm1097, %v1095, %v1099
  %v1102 = vsel %vm1098, %v1096, %v1100
  %v1103 = vsel %vm143, %v1101, -1e+30
  %v1104 = vsel %vm144, %v1102, -1e+30
  %v1105 = vsel %vm166, %v1103, -inf
  %1106 = vmax.xlane.f32.xlu0 %v1105
  %v1107 = vpop.xlane.xlu0 %1106
  %v1108 = vsel %vm166, %v1104, -inf
  %1109 = vmax.xlane.f32.xlu0 %v1108
  %v1110 = vpop.xlane.xlu0 %1109
  %v1111 = vsub.f32 %v1103, %v1107
  %v1112 = vsub.f32 %v1104, %v1110
  %v1113 = vmul.f32 %v1111, 1.442695
  %v1114 = vpow.pop %v1113
  %v1115 = vmul.f32 %v1112, 1.442695
  %v1116 = vpow.pop %v1115
  %v1117 = vsel %vm143, %v1114, 0.0
  %v1118 = vsel %vm144, %v1116, 0.0
  %v1119 = vsel %vm166, %v1117, 0.0
  %1120 = vadd.xlane.f32.xlu0 %v1119
  %v1121 = vpop.xlane.xlu0 %1120
  %v1122 = vsel %vm166, %v1118, 0.0
  %1123 = vadd.xlane.f32.xlu0 %v1122
  %v1124 = vpop.xlane.xlu0 %1123
  %v1125 = vrcp.pop %v1121
  %v1126 = vrcp.pop %v1124
  %v1127 = vmul.f32 %v1117, %v1125
  %v1128 = vmul.f32 %v1118, %v1126
  %v1129 = vpack.c.bf16 %v1128, %v1127
  %v1131 = vsel %vm166, %v1129, 0
  %1133 = vmatpush.bf16.msra.mxu0 0
  %1134 = vmatpush.bf16.msra.mxu0 0
  %1135 = vmatpush.bf16.msra.mxu0 0
  %1136 = vmatpush.bf16.msra.mxu0 0
  %1137 = vmatpush.bf16.msra.mxu0 0
  %1138 = vmatpush.bf16.msra.mxu0 0
  %1139 = vmatpush.bf16.msra.mxu0 0
  %1140 = vmatpush.bf16.msra.mxu0 %v594
  %1141 = vmatmul.bf16.gmra.mxu0 %v1131
  %v1142 = vpop.f32.mrf.mxu0
  %v1143 = vadd.f32 0.0, %v1142
  %v1144 = vpop.f32.mrf.mxu0
  %v1145 = vadd.f32 0.0, %v1144
  %1146 = vdwg.mxu0
  %v1147 = vadd.f32 %v1084, %v1143
  %v1148 = vadd.f32 %v1085, %v1145
  %v1149 = vmul.f32 %v1147, 0.25
  %v1150 = vmul.f32 %v1148, 0.25
  %v1152 = vperm.slane %v484, 0
  %v1154 = vadd.f32 %v1149, %v1152
  %v1155 = vadd.f32 %v1150, %v1152
  %v1156 = vmax.f32 %v1154, 0.0
  %v1157 = vmax.f32 %v1155, 0.0
  %1158 = vst [vmem:[%s10] sm:$0xff] %v1156
  %1159 = vst [vmem:[%s10 + $0x8] sm:$0xff] %v1157
  // Predicated region
  $region42: #{gcn_forward.1} parent=0 // pred_check
    _
  $region43: #{gcn_forward.1} parent=0 // pred_check_branch
    %1161 = sbr.rel (0) target = $region45
  $region44: #{gcn_forward.1} parent=0 // pred_region
    _
  $region45: #{gcn_forward.1} parent=0 // pred_fallthru
    _
  // Predicated region
  $region46: #{gcn_forward.1} parent=0 // pred_check
    _
  $region47: #{gcn_forward.1} parent=0 // pred_check_branch
    %1163 = sbr.rel (0) target = $region49
  $region48: #{gcn_forward.1} parent=0 // pred_region
    _
  $region49: #{gcn_forward.1} parent=0 // pred_fallthru
    _

</llo_original>
